<compile_context>
chip_gen: v7x
topology: tpu7x:2x2x1
jax: 0.10.0
libtpu: 0.0.40
codegen_flags: <defaults>
</compile_context>

<pallas_src>
import functools

import jax
import jax.numpy as jnp
from jax import lax
from jax.experimental import pallas as pl
from jax.experimental.pallas import tpu as pltpu

LANES = 128
MAX_TILE_ROWS = 8192            # 8192 x 128 x 4B = 4 MiB per f32 input block
SMALL_INPUT_ELEMS = 512 * LANES  # below this, plain XLA beats a kernel launch


def _num_tensorcores() -> int:
    """Best-effort TensorCores-per-chip query; 1 is always a safe answer."""
    try:
        dev = jax.devices()[0]
    except Exception:
        return 1
    for attr in ("num_cores", "core_count"):
        n = getattr(dev, attr, None)
        if isinstance(n, int) and 1 <= n <= 8:
            return n
    try:
        info = pltpu.get_tpu_info()
        for attr in ("num_cores", "core_count", "num_tensorcores",
                     "tensorcore_count", "num_cores_per_chip"):
            n = getattr(info, attr, None)
            if isinstance(n, int) and 1 <= n <= 8:
                return n
    except Exception:
        pass
    kind = str(getattr(dev, "device_kind", "")).lower()
    # Single-TC generations first.
    if any(s in kind for s in ("v5 lite", "v5e", "v5litepod", "v6 lite", "v6e")):
        return 1
    # Multi-TC (megacore-style) generations.
    if any(s in kind for s in ("v4", "v5p", "7")):
        return 2
    return 1


def _mse_partial_kernel(x_ref, y_ref, o_ref, acc_ref, *,
                        rows, tile_rows, tiles, tiles_per_split, need_mask):
    """Per-core-split partial sum of (x - y)^2 over its slice of row-tiles."""
    c = pl.program_id(0)   # core-split index   ("parallel")
    t = pl.program_id(1)   # row-tile index     ("arbitrary", carries acc)

    @pl.when(t == 0)
    def _():
        acc_ref[...] = jnp.zeros_like(acc_ref)

    d = x_ref[...].astype(jnp.float32) - y_ref[...].astype(jnp.float32)
    sq = d * d

    def _accumulate(vals):
        # (tile_rows, 128) -> (tile_rows//8, 8, 128); sum over the leading axis
        # is pure vreg+vreg VPU work (no XLU), result is a single (8, 128) vreg.
        acc_ref[...] += vals.reshape(tile_rows // 8, 8, LANES).sum(axis=0)

    if need_mask:
        logical_tile = c * tiles_per_split + t       # unclamped tile index
        row_start = logical_tile * tile_rows
        interior = row_start + tile_rows <= rows     # fully in-bounds tile

        @pl.when(interior)
        def _():
            _accumulate(sq)

        @pl.when(jnp.logical_not(interior))
        def _():
            # Rows at/after `rows` (OOB garbage of the partial last tile, or
            # entire duplicated clamped blocks) contribute exactly 0.
            row_ids = lax.broadcasted_iota(jnp.int32, sq.shape, 0)
            masked = jnp.where(row_ids < (rows - row_start), sq, 0.0)
            _accumulate(masked)
    else:
        _accumulate(sq)

    @pl.when(t == tiles_per_split - 1)
    def _():
        o_ref[...] = jnp.sum(acc_ref[...]).reshape(1, 1, 1)


def hint_loss(logits: jax.Array, targets: jax.Array) -> jax.Array:
    """MSE loss (mean reduction) between two same-shaped tensors, via Pallas."""
    assert logits.shape == targets.shape, "HintLoss requires matching shapes"
    n_elems = logits.size

    # Small-input fast path: launch overhead would dominate the kernel.
    if n_elems <= SMALL_INPUT_ELEMS:
        d = logits.astype(jnp.float32) - targets.astype(jnp.float32)
        return jnp.mean(d * d)

    x = logits.reshape(-1)
    y = targets.reshape(-1)

    # Rare path: numel not a multiple of 128. Zero-padding contributes zero
    # diff, so the sum is unchanged and we still divide by the original count.
    # TODO(synk): this still materializes padded copies of both inputs; a true
    # zero-copy fix needs a 1-D BlockSpec / manual DMA with a flat-index mask.
    lane_pad = (-n_elems) % LANES
    if lane_pad:
        x = jnp.pad(x, (0, lane_pad))
        y = jnp.pad(y, (0, lane_pad))

    rows = x.size // LANES
    x2 = x.reshape(rows, LANES)
    y2 = y.reshape(rows, LANES)

    # Generation-aware core split (1 on single-TC v5e/v6e, 2 on multi-TC).
    num_cores = _num_tensorcores()

    # rows > 512 here (smaller inputs took the fast path); keep tile_rows a
    # multiple of 8 so the in-kernel (n, 8, 128) vreg reduction is layout-free.
    per_core_rows = pl.cdiv(rows, num_cores)
    tile_rows = max(8, min(MAX_TILE_ROWS, (per_core_rows // 8) * 8))
    tiles = pl.cdiv(rows, tile_rows)
    num_splits = min(num_cores, tiles)
    tiles_per_split = pl.cdiv(tiles, num_splits)
    need_mask = (rows % tile_rows != 0) or (num_splits * tiles_per_split != tiles)

    def in_map(c, t):
        # Clamp so the DMA source block is always in-bounds; the in-kernel
        # logical-row mask zeroes any duplicated/out-of-range contribution.
        return (jnp.minimum(c * tiles_per_split + t, tiles - 1), 0)

    kernel = functools.partial(
        _mse_partial_kernel,
        rows=rows,
        tile_rows=tile_rows,
        tiles=tiles,
        tiles_per_split=tiles_per_split,
        need_mask=need_mask,
    )

    # TODO(synk): on v7x, verify the leading "parallel" axis actually shards
    # across both TensorCores; if not, switch it to pltpu.CORE_PARALLEL.
    partials = pl.pallas_call(
        kernel,
        out_shape=jax.ShapeDtypeStruct((num_splits, 1, 1), jnp.float32),
        grid_spec=pltpu.PrefetchScalarGridSpec(
            num_scalar_prefetch=0,
            grid=(num_splits, tiles_per_split),
            in_specs=[
                pl.BlockSpec((tile_rows, LANES), in_map),
                pl.BlockSpec((tile_rows, LANES), in_map),
            ],
            out_specs=pl.BlockSpec((1, 1, 1), lambda c, t: (c, 0, 0)),
            scratch_shapes=[pltpu.VMEM((8, LANES), jnp.float32)],
        ),
        compiler_params=pltpu.CompilerParams(
            dimension_semantics=("parallel", "arbitrary"),
            vmem_limit_bytes=32 * 1024 * 1024,
        ),
    )(x2, y2)

    # Mean over the ORIGINAL element count (padding / masked rows contribute 0).
    return (jnp.sum(partials) / jnp.float32(n_elems)).astype(jnp.float32)


if __name__ == "__main__":
    key = jax.random.PRNGKey(0)
    k1, k2, k3, k4, k5, k6 = jax.random.split(key, 6)

    # 1) Module-spec demo shape: student/teacher intermediate feature maps
    #    (small NCHW -> XLA fast path).
    a = jax.random.normal(k1, (2, 4, 16, 16), dtype=jnp.float32)
    b = jax.random.normal(k2, (2, 4, 16, 16), dtype=jnp.float32)
    loss_small = hint_loss(a, b)
    jax.block_until_ready(loss_small)
    ref_small = jnp.mean((a - b) ** 2)
    assert jnp.allclose(loss_small, ref_small, rtol=1e-4, atol=1e-6), (
        loss_small, ref_small)

    # 2) Larger feature map -> exercises the Pallas kernel path.
    c = jax.random.normal(k3, (4, 32, 32, 64), dtype=jnp.float32)
    d = jax.random.normal(k4, (4, 32, 32, 64), dtype=jnp.float32)
    loss_big = hint_loss(c, d)
    jax.block_until_ready(loss_big)
    ref_big = jnp.mean((c - d) ** 2)
    assert jnp.allclose(loss_big, ref_big, rtol=1e-4, atol=1e-6), (
        loss_big, ref_big)

    # 3) Ragged numel (not a multiple of 128), multi-tile with a partial tail
    #    -> exercises the pad fallback and the in-kernel mask branch.
    e = jax.random.normal(k5, (8200, 130), dtype=jnp.float32)
    f = jax.random.normal(k6, (8200, 130), dtype=jnp.float32)
    loss_odd = hint_loss(e, f)
    jax.block_until_ready(loss_odd)
    ref_odd = jnp.mean((e - f) ** 2)
    assert jnp.allclose(loss_odd, ref_odd, rtol=1e-4, atol=1e-5), (
        loss_odd, ref_odd)

    print("KERNEL_OK")
</pallas_src>

<mosaic_0001>
module attributes {stable_mosaic.version = 11 : i64} {
  func.func @_mse_partial_kernel(%arg0: i32, %arg1: i32, %arg2: memref<2048x128xf32, #tpu.memory_space<vmem>>, %arg3: memref<2048x128xf32, #tpu.memory_space<vmem>>, %arg4: memref<1x1x1xf32, #tpu.memory_space<vmem>>, %arg5: memref<8x128xf32, #tpu.memory_space<vmem>>) attributes {dimension_semantics = [#tpu.dimension_semantics<parallel>, #tpu.dimension_semantics<arbitrary>], iteration_bounds = array<i64: 1, 1>, scalar_prefetch = 0 : i64, scratch_operands = 1 : i64, tpu.core_type = #tpu.core_type<tc>, window_params = [{transform_indices = @transform_0, window_bounds = array<i64: 2048, 128>}, {transform_indices = @transform_1, window_bounds = array<i64: 2048, 128>}, {transform_indices = @transform_2, window_bounds = array<i64: 1, 1, 1>}]} {
    %c0_i32 = arith.constant 0 : i32
    %0 = arith.cmpi eq, %arg1, %c0_i32 : i32
    %1 = arith.extui %0 : i1 to i32
    %c0_i32_0 = arith.constant 0 : i32
    %2 = arith.cmpi ne, %1, %c0_i32_0 : i32
    scf.if %2 {
      %cst_10 = arith.constant 0.000000e+00 : f32
      %15 = vector.broadcast %cst_10 : f32 to vector<8x128xf32>
      %c0_11 = arith.constant 0 : index
      %c0_12 = arith.constant 0 : index
      %16 = vector.load %arg5[%c0_11, %c0_12] : memref<8x128xf32, #tpu.memory_space<vmem>>, vector<8x128xf32>
      tpu.vector_store %arg5[%c0_11, %c0_12], %15 {strides = array<i32>} : memref<8x128xf32, #tpu.memory_space<vmem>>, vector<8x128xf32>,
    } else {
    }
    %c0 = arith.constant 0 : index
    %c0_1 = arith.constant 0 : index
    %3 = vector.load %arg2[%c0, %c0_1] : memref<2048x128xf32, #tpu.memory_space<vmem>>, vector<2048x128xf32>
    %c0_2 = arith.constant 0 : index
    %c0_3 = arith.constant 0 : index
    %4 = vector.load %arg3[%c0_2, %c0_3] : memref<2048x128xf32, #tpu.memory_space<vmem>>, vector<2048x128xf32>
    %5 = arith.subf %3, %4 : vector<2048x128xf32>
    %6 = arith.mulf %5, %5 : vector<2048x128xf32>
    %c0_4 = arith.constant 0 : index
    %c0_5 = arith.constant 0 : index
    %7 = vector.load %arg5[%c0_4, %c0_5] : memref<8x128xf32, #tpu.memory_space<vmem>>, vector<8x128xf32>
    %8 = vector.shape_cast %6 : vector<2048x128xf32> to vector<256x8x128xf32>
    %cst = arith.constant dense<0.000000e+00> : vector<8x128xf32>
    %9 = vector.multi_reduction <add>, %8, %cst [0] : vector<256x8x128xf32> to vector<8x128xf32>
    %10 = arith.addf %7, %9 : vector<8x128xf32>
    %c0_6 = arith.constant 0 : index
    %c0_7 = arith.constant 0 : index
    %11 = vector.load %arg5[%c0_6, %c0_7] : memref<8x128xf32, #tpu.memory_space<vmem>>, vector<8x128xf32>
    tpu.vector_store %arg5[%c0_6, %c0_7], %10 {strides = array<i32>} : memref<8x128xf32, #tpu.memory_space<vmem>>, vector<8x128xf32>,
    %c0_i32_8 = arith.constant 0 : i32
    %12 = arith.cmpi eq, %arg1, %c0_i32_8 : i32
    %13 = arith.extui %12 : i1 to i32
    %c0_i32_9 = arith.constant 0 : i32
    %14 = arith.cmpi ne, %13, %c0_i32_9 : i32
    scf.if %14 {
      %c0_10 = arith.constant 0 : index
      %c0_11 = arith.constant 0 : index
      %15 = vector.load %arg5[%c0_10, %c0_11] : memref<8x128xf32, #tpu.memory_space<vmem>>, vector<8x128xf32>
      %16 = vector.shape_cast %15 : vector<8x128xf32> to vector<1x8x128xf32>
      %cst_12 = arith.constant dense<0.000000e+00> : vector<1xf32>
      %17 = vector.multi_reduction <add>, %16, %cst_12 [1, 2] : vector<1x8x128xf32> to vector<1xf32>
      %18 = vector.shape_cast %17 : vector<1xf32> to vector<1x1x1xf32>
      %19 = vector.extract %18[0, 0, 0] : f32 from vector<1x1x1xf32>
      %20 = vector.broadcast %19 : f32 to vector<1x1x1xf32>
      %c0_13 = arith.constant 0 : index
      %c0_14 = arith.constant 0 : index
      %c0_15 = arith.constant 0 : index
      %21 = vector.load %arg4[%c0_13, %c0_14, %c0_15] : memref<1x1x1xf32, #tpu.memory_space<vmem>>, vector<1x1x1xf32>
      tpu.vector_store %arg4[%c0_13, %c0_14, %c0_15], %20 {strides = array<i32>} : memref<1x1x1xf32, #tpu.memory_space<vmem>>, vector<1x1x1xf32>,
    } else {
    }
    return
  }
  func.func @transform_0(%arg0: i32, %arg1: i32) -> (i32, i32) {
    %c1_i32 = arith.constant 1 : i32
    %0 = arith.muli %arg0, %c1_i32 : i32
    %1 = arith.addi %0, %arg1 : i32
    %c0_i32 = arith.constant 0 : i32
    %2 = arith.minsi %1, %c0_i32 : i32
    %c0_i32_0 = arith.constant 0 : i32
    %c0_i32_1 = arith.constant 0 : i32
    return %2, %c0_i32_0 : i32, i32
  }
  func.func @transform_1(%arg0: i32, %arg1: i32) -> (i32, i32) {
    %c1_i32 = arith.constant 1 : i32
    %0 = arith.muli %arg0, %c1_i32 : i32
    %1 = arith.addi %0, %arg1 : i32
    %c0_i32 = arith.constant 0 : i32
    %2 = arith.minsi %1, %c0_i32 : i32
    %c0_i32_0 = arith.constant 0 : i32
    %c0_i32_1 = arith.constant 0 : i32
    return %2, %c0_i32_0 : i32, i32
  }
  func.func @transform_2(%arg0: i32, %arg1: i32) -> (i32, i32, i32) {
    %c0_i32 = arith.constant 0 : i32
    %c0_i32_0 = arith.constant 0 : i32
    %c0_i32_1 = arith.constant 0 : i32
    return %arg0, %c0_i32, %c0_i32_0 : i32, i32, i32
  }
}

</mosaic_0001>

<llo_original>
// kernel: tpu_custom_call.1
$region0: #{tpu_custom_call.1}
  #allocation0 [shape = 'u32[]', space=smem, size = 0x4, offset = 0x4, fixed_abs, tag = 'smem constant byte address 0x4 - core index']
  #allocation1 [shape = 'u32[144,128]{1,0:T(1,128)}', space=vmem, size = 0x12000, scoped, tag = 'internal scratch']
  #allocation2 [shape = 'f32[8,128]{1,0:T(8,128)}', space=vmem, size = 0x1000, scoped, tag = 'scratch operand']
  %s0 = inlined_call_operand.hbm [shape: f32[2048,128], index: 0, kind: input, shape index: {}]
  %s1 = inlined_call_operand.hbm [shape: f32[2048,128], index: 1, kind: input, shape index: {}]
  %s2 = inlined_call_operand.hbm [shape: f32[1,1,1], index: 2, kind: output, shape index: {}]
  %s3 = sld [smem:[#allocation0]]
  $region34: #{tpu_custom_call.1} parent=0
    _
  %s5 = ssub.s32 1, %s3
  %s6 = scalar_select 0, %s5, %s3
  $region1: #{tpu_custom_call.1} parent=0
    #allocation3 [shape = 'u8[1048576]{0}', space=vmem, size = 0x100000, scoped, tag = 'input window, operand 0, single buffered']
    #allocation4 [shape = 's32[1]{0}', space=sflag, size = 0x4, scoped, tag = 'scoped memory for tpu_custom_call.1']
    #allocation5 [shape = 's32[1]{0}', space=sflag, size = 0x4, scoped, tag = 'scoped memory for tpu_custom_call.1']
    #allocation6 [shape = 'u8[1048576]{0}', space=vmem, size = 0x100000, scoped, tag = 'input window, operand 1, single buffered']
    #allocation7 [shape = 's32[1]{0}', space=sflag, size = 0x4, scoped, tag = 'scoped memory for tpu_custom_call.1']
    #allocation8 [shape = 'u8[512]{0}', space=vmem, size = 0x400, scoped, tag = 'output window, operand 0, single buffered']
    %7 = vsyncpa [#allocation4], 0
    %8 = vsyncpa [#allocation7], 0
    %9 = vsyncpa [#allocation5], 0
    // Predicated region
    $region2: #{tpu_custom_call.1} parent=1 // pred_check
      _
    $region3: #{tpu_custom_call.1} parent=1 // pred_check_branch
      %11 = sbr.rel (0) target = $region5
    $region4: #{tpu_custom_call.1} parent=1 // pred_region
      %s12 = sadd.s32 0, 0
      %p13 = scmp.lt.s32.totalorder %s12, 0
      %s14 = scalar_select %p13, %s12, 0
      %s15 = smul.u32 256, %s14
      %s17 = ssub.s32 32768, 32768
      %18 = vsyncadd [#allocation4], %s17
      %s19 = smul.addr %s15, 128
      %s20 = scalar_lea.hbm %s0, %s19
      %s21 = sshll.u32 [#allocation3], 4
      %s22 = int_to_ptr.vmem [resolvable:$true] %s21
      %27 = dma.hbm_to_vmem [thread:$0]  %s20, 32768, %s22, [#allocation4], 128, 128, 8
    $region5: #{tpu_custom_call.1} parent=1 // pred_fallthru
      _
    // Predicated region
    $region6: #{tpu_custom_call.1} parent=1 // pred_check
      _
    $region7: #{tpu_custom_call.1} parent=1 // pred_check_branch
      %29 = sbr.rel (0) target = $region9
    $region8: #{tpu_custom_call.1} parent=1 // pred_region
      %s30 = sadd.s32 0, 0
      %p31 = scmp.lt.s32.totalorder %s30, 0
      %s32 = scalar_select %p31, %s30, 0
      %s33 = smul.u32 256, %s32
      %s35 = ssub.s32 32768, 32768
      %36 = vsyncadd [#allocation7], %s35
      %s37 = smul.addr %s33, 128
      %s38 = scalar_lea.hbm %s1, %s37
      %s39 = sshll.u32 [#allocation6], 4
      %s40 = int_to_ptr.vmem [resolvable:$true] %s39
      %45 = dma.hbm_to_vmem [thread:$0]  %s38, 32768, %s40, [#allocation7], 128, 128, 8
    $region9: #{tpu_custom_call.1} parent=1 // pred_fallthru
      _
    // Predicated region
    $region10: #{tpu_custom_call.1} parent=1 // pred_check
      _
    $region11: #{tpu_custom_call.1} parent=1 // pred_check_branch
      %47 = sbr.rel (0) target = $region13
    $region12: #{tpu_custom_call.1} parent=1 // pred_region
      %48 = dma.done [#allocation4], 32768
    $region13: #{tpu_custom_call.1} parent=1 // pred_fallthru
      _
    // Predicated region
    $region14: #{tpu_custom_call.1} parent=1 // pred_check
      _
    $region15: #{tpu_custom_call.1} parent=1 // pred_check_branch
      %50 = sbr.rel (0) target = $region17
    $region16: #{tpu_custom_call.1} parent=1 // pred_region
      %51 = dma.done [#allocation7], 32768
    $region17: #{tpu_custom_call.1} parent=1 // pred_fallthru
      _
    %s52 = sadd.s32 0, 0
    %p53 = scmp.lt.s32.totalorder %s52, 0
    %s54 = scalar_select %p53, %s52, 0
    %s55 = smul.u32 256, %s54
    %s56 = sadd.s32 0, 0
    %p57 = scmp.lt.s32.totalorder %s56, 0
    %s58 = scalar_select %p57, %s56, 0
    %s59 = smul.u32 256, %s58
    %p60 = scmp.eq.s32.totalorder 0, 0
    // Predicated region
    $region18: #{tpu_custom_call.1} parent=1 // pred_check
      %p61 = pneg %p60
    $region19: #{tpu_custom_call.1} parent=1 // pred_check_branch
      %63 = sbr.rel (%p61) target = $region21
    $region20: #{tpu_custom_call.1} parent=1 // pred_region
      %64 = vst [vmem:[#allocation2] sm:$0xff] 0.0
    $region21: #{tpu_custom_call.1} parent=1 // pred_fallthru
      _
    %v65 = vld [vmem:[#allocation3] sm:$0xff]
    %v66 = vld [vmem:[#allocation3 + $0x8] sm:$0xff]
    %v67 = vld [vmem:[#allocation3 + $0x10] sm:$0xff]
    %v68 = vld [vmem:[#allocation3 + $0x18] sm:$0xff]
    %v69 = vld [vmem:[#allocation3 + $0x20] sm:$0xff]
    %v70 = vld [vmem:[#allocation3 + $0x28] sm:$0xff]
    %v71 = vld [vmem:[#allocation3 + $0x30] sm:$0xff]
    %v72 = vld [vmem:[#allocation3 + $0x38] sm:$0xff]
    %v73 = vld [vmem:[#allocation3 + $0x40] sm:$0xff]
    %v74 = vld [vmem:[#allocation3 + $0x48] sm:$0xff]
    %v75 = vld [vmem:[#allocation3 + $0x50] sm:$0xff]
    %v76 = vld [vmem:[#allocation3 + $0x58] sm:$0xff]
    %v77 = vld [vmem:[#allocation3 + $0x60] sm:$0xff]
    %v78 = vld [vmem:[#allocation3 + $0x68] sm:$0xff]
    %v79 = vld [vmem:[#allocation3 + $0x70] sm:$0xff]
    %v80 = vld [vmem:[#allocation3 + $0x78] sm:$0xff]
    %v81 = vld [vmem:[#allocation3 + $0x80] sm:$0xff]
    %v82 = vld [vmem:[#allocation3 + $0x88] sm:$0xff]
    %v83 = vld [vmem:[#allocation3 + $0x90] sm:$0xff]
    %v84 = vld [vmem:[#allocation3 + $0x98] sm:$0xff]
    %v85 = vld [vmem:[#allocation3 + $0xa0] sm:$0xff]
    %v86 = vld [vmem:[#allocation3 + $0xa8] sm:$0xff]
    %v87 = vld [vmem:[#allocation3 + $0xb0] sm:$0xff]
    %v88 = vld [vmem:[#allocation3 + $0xb8] sm:$0xff]
    %v89 = vld [vmem:[#allocation3 + $0xc0] sm:$0xff]
    %v90 = vld [vmem:[#allocation3 + $0xc8] sm:$0xff]
    %v91 = vld [vmem:[#allocation3 + $0xd0] sm:$0xff]
    %v92 = vld [vmem:[#allocation3 + $0xd8] sm:$0xff]
    %v93 = vld [vmem:[#allocation3 + $0xe0] sm:$0xff]
    %v94 = vld [vmem:[#allocation3 + $0xe8] sm:$0xff]
    %v95 = vld [vmem:[#allocation3 + $0xf0] sm:$0xff]
    %v96 = vld [vmem:[#allocation3 + $0xf8] sm:$0xff]
    %v97 = vld [vmem:[#allocation3 + $0x100] sm:$0xff]
    %v98 = vld [vmem:[#allocation3 + $0x108] sm:$0xff]
    %v99 = vld [vmem:[#allocation3 + $0x110] sm:$0xff]
    %v100 = vld [vmem:[#allocation3 + $0x118] sm:$0xff]
    %v101 = vld [vmem:[#allocation3 + $0x120] sm:$0xff]
    %v102 = vld [vmem:[#allocation3 + $0x128] sm:$0xff]
    %v103 = vld [vmem:[#allocation3 + $0x130] sm:$0xff]
    %v104 = vld [vmem:[#allocation3 + $0x138] sm:$0xff]
    %v105 = vld [vmem:[#allocation3 + $0x140] sm:$0xff]
    %v106 = vld [vmem:[#allocation3 + $0x148] sm:$0xff]
    %v107 = vld [vmem:[#allocation3 + $0x150] sm:$0xff]
    %v108 = vld [vmem:[#allocation3 + $0x158] sm:$0xff]
    %v109 = vld [vmem:[#allocation3 + $0x160] sm:$0xff]
    %v110 = vld [vmem:[#allocation3 + $0x168] sm:$0xff]
    %v111 = vld [vmem:[#allocation3 + $0x170] sm:$0xff]
    %v112 = vld [vmem:[#allocation3 + $0x178] sm:$0xff]
    %v113 = vld [vmem:[#allocation3 + $0x180] sm:$0xff]
    %v114 = vld [vmem:[#allocation3 + $0x188] sm:$0xff]
    %v115 = vld [vmem:[#allocation3 + $0x190] sm:$0xff]
    %v116 = vld [vmem:[#allocation3 + $0x198] sm:$0xff]
    %v117 = vld [vmem:[#allocation3 + $0x1a0] sm:$0xff]
    %v118 = vld [vmem:[#allocation3 + $0x1a8] sm:$0xff]
    %v119 = vld [vmem:[#allocation3 + $0x1b0] sm:$0xff]
    %v120 = vld [vmem:[#allocation3 + $0x1b8] sm:$0xff]
    %v121 = vld [vmem:[#allocation3 + $0x1c0] sm:$0xff]
    %v122 = vld [vmem:[#allocation3 + $0x1c8] sm:$0xff]
    %v123 = vld [vmem:[#allocation3 + $0x1d0] sm:$0xff]
    %v124 = vld [vmem:[#allocation3 + $0x1d8] sm:$0xff]
    %v125 = vld [vmem:[#allocation3 + $0x1e0] sm:$0xff]
    %v126 = vld [vmem:[#allocation3 + $0x1e8] sm:$0xff]
    %v127 = vld [vmem:[#allocation3 + $0x1f0] sm:$0xff]
    %v128 = vld [vmem:[#allocation3 + $0x1f8] sm:$0xff]
    %v129 = vld [vmem:[#allocation3 + $0x200] sm:$0xff]
    %v130 = vld [vmem:[#allocation3 + $0x208] sm:$0xff]
    %v131 = vld [vmem:[#allocation3 + $0x210] sm:$0xff]
    %v132 = vld [vmem:[#allocation3 + $0x218] sm:$0xff]
    %v133 = vld [vmem:[#allocation3 + $0x220] sm:$0xff]
    %v134 = vld [vmem:[#allocation3 + $0x228] sm:$0xff]
    %v135 = vld [vmem:[#allocation3 + $0x230] sm:$0xff]
    %v136 = vld [vmem:[#allocation3 + $0x238] sm:$0xff]
    %v137 = vld [vmem:[#allocation3 + $0x240] sm:$0xff]
    %v138 = vld [vmem:[#allocation3 + $0x248] sm:$0xff]
    %v139 = vld [vmem:[#allocation3 + $0x250] sm:$0xff]
    %v140 = vld [vmem:[#allocation3 + $0x258] sm:$0xff]
    %v141 = vld [vmem:[#allocation3 + $0x260] sm:$0xff]
    %v142 = vld [vmem:[#allocation3 + $0x268] sm:$0xff]
    %v143 = vld [vmem:[#allocation3 + $0x270] sm:$0xff]
    %v144 = vld [vmem:[#allocation3 + $0x278] sm:$0xff]
    %v145 = vld [vmem:[#allocation3 + $0x280] sm:$0xff]
    %v146 = vld [vmem:[#allocation3 + $0x288] sm:$0xff]
    %v147 = vld [vmem:[#allocation3 + $0x290] sm:$0xff]
    %v148 = vld [vmem:[#allocation3 + $0x298] sm:$0xff]
    %v149 = vld [vmem:[#allocation3 + $0x2a0] sm:$0xff]
    %v150 = vld [vmem:[#allocation3 + $0x2a8] sm:$0xff]
    %v151 = vld [vmem:[#allocation3 + $0x2b0] sm:$0xff]
    %v152 = vld [vmem:[#allocation3 + $0x2b8] sm:$0xff]
    %v153 = vld [vmem:[#allocation3 + $0x2c0] sm:$0xff]
    %v154 = vld [vmem:[#allocation3 + $0x2c8] sm:$0xff]
    %v155 = vld [vmem:[#allocation3 + $0x2d0] sm:$0xff]
    %v156 = vld [vmem:[#allocation3 + $0x2d8] sm:$0xff]
    %v157 = vld [vmem:[#allocation3 + $0x2e0] sm:$0xff]
    %v158 = vld [vmem:[#allocation3 + $0x2e8] sm:$0xff]
    %v159 = vld [vmem:[#allocation3 + $0x2f0] sm:$0xff]
    %v160 = vld [vmem:[#allocation3 + $0x2f8] sm:$0xff]
    %v161 = vld [vmem:[#allocation3 + $0x300] sm:$0xff]
    %v162 = vld [vmem:[#allocation3 + $0x308] sm:$0xff]
    %v163 = vld [vmem:[#allocation3 + $0x310] sm:$0xff]
    %v164 = vld [vmem:[#allocation3 + $0x318] sm:$0xff]
    %v165 = vld [vmem:[#allocation3 + $0x320] sm:$0xff]
    %v166 = vld [vmem:[#allocation3 + $0x328] sm:$0xff]
    %v167 = vld [vmem:[#allocation3 + $0x330] sm:$0xff]
    %v168 = vld [vmem:[#allocation3 + $0x338] sm:$0xff]
    %v169 = vld [vmem:[#allocation3 + $0x340] sm:$0xff]
    %v170 = vld [vmem:[#allocation3 + $0x348] sm:$0xff]
    %v171 = vld [vmem:[#allocation3 + $0x350] sm:$0xff]
    %v172 = vld [vmem:[#allocation3 + $0x358] sm:$0xff]
    %v173 = vld [vmem:[#allocation3 + $0x360] sm:$0xff]
    %v174 = vld [vmem:[#allocation3 + $0x368] sm:$0xff]
    %v175 = vld [vmem:[#allocation3 + $0x370] sm:$0xff]
    %v176 = vld [vmem:[#allocation3 + $0x378] sm:$0xff]
    %v177 = vld [vmem:[#allocation3 + $0x380] sm:$0xff]
    %v178 = vld [vmem:[#allocation3 + $0x388] sm:$0xff]
    %v179 = vld [vmem:[#allocation3 + $0x390] sm:$0xff]
    %v180 = vld [vmem:[#allocation3 + $0x398] sm:$0xff]
    %v181 = vld [vmem:[#allocation3 + $0x3a0] sm:$0xff]
    %v182 = vld [vmem:[#allocation3 + $0x3a8] sm:$0xff]
    %v183 = vld [vmem:[#allocation3 + $0x3b0] sm:$0xff]
    %v184 = vld [vmem:[#allocation3 + $0x3b8] sm:$0xff]
    %v185 = vld [vmem:[#allocation3 + $0x3c0] sm:$0xff]
    %v186 = vld [vmem:[#allocation3 + $0x3c8] sm:$0xff]
    %v187 = vld [vmem:[#allocation3 + $0x3d0] sm:$0xff]
    %v188 = vld [vmem:[#allocation3 + $0x3d8] sm:$0xff]
    %v189 = vld [vmem:[#allocation3 + $0x3e0] sm:$0xff]
    %v190 = vld [vmem:[#allocation3 + $0x3e8] sm:$0xff]
    %v191 = vld [vmem:[#allocation3 + $0x3f0] sm:$0xff]
    %v192 = vld [vmem:[#allocation3 + $0x3f8] sm:$0xff]
    %v193 = vld [vmem:[#allocation3 + $0x400] sm:$0xff]
    %v194 = vld [vmem:[#allocation3 + $0x408] sm:$0xff]
    %v195 = vld [vmem:[#allocation3 + $0x410] sm:$0xff]
    %v196 = vld [vmem:[#allocation3 + $0x418] sm:$0xff]
    %v197 = vld [vmem:[#allocation3 + $0x420] sm:$0xff]
    %v198 = vld [vmem:[#allocation3 + $0x428] sm:$0xff]
    %v199 = vld [vmem:[#allocation3 + $0x430] sm:$0xff]
    %v200 = vld [vmem:[#allocation3 + $0x438] sm:$0xff]
    %v201 = vld [vmem:[#allocation3 + $0x440] sm:$0xff]
    %v202 = vld [vmem:[#allocation3 + $0x448] sm:$0xff]
    %v203 = vld [vmem:[#allocation3 + $0x450] sm:$0xff]
    %v204 = vld [vmem:[#allocation3 + $0x458] sm:$0xff]
    %v205 = vld [vmem:[#allocation3 + $0x460] sm:$0xff]
    %v206 = vld [vmem:[#allocation3 + $0x468] sm:$0xff]
    %v207 = vld [vmem:[#allocation3 + $0x470] sm:$0xff]
    %v208 = vld [vmem:[#allocation3 + $0x478] sm:$0xff]
    %v209 = vld [vmem:[#allocation3 + $0x480] sm:$0xff]
    %v210 = vld [vmem:[#allocation3 + $0x488] sm:$0xff]
    %v211 = vld [vmem:[#allocation3 + $0x490] sm:$0xff]
    %v212 = vld [vmem:[#allocation3 + $0x498] sm:$0xff]
    %v213 = vld [vmem:[#allocation3 + $0x4a0] sm:$0xff]
    %v214 = vld [vmem:[#allocation3 + $0x4a8] sm:$0xff]
    %v215 = vld [vmem:[#allocation3 + $0x4b0] sm:$0xff]
    %v216 = vld [vmem:[#allocation3 + $0x4b8] sm:$0xff]
    %v217 = vld [vmem:[#allocation3 + $0x4c0] sm:$0xff]
    %v218 = vld [vmem:[#allocation3 + $0x4c8] sm:$0xff]
    %v219 = vld [vmem:[#allocation3 + $0x4d0] sm:$0xff]
    %v220 = vld [vmem:[#allocation3 + $0x4d8] sm:$0xff]
    %v221 = vld [vmem:[#allocation3 + $0x4e0] sm:$0xff]
    %v222 = vld [vmem:[#allocation3 + $0x4e8] sm:$0xff]
    %v223 = vld [vmem:[#allocation3 + $0x4f0] sm:$0xff]
    %v224 = vld [vmem:[#allocation3 + $0x4f8] sm:$0xff]
    %v225 = vld [vmem:[#allocation3 + $0x500] sm:$0xff]
    %v226 = vld [vmem:[#allocation3 + $0x508] sm:$0xff]
    %v227 = vld [vmem:[#allocation3 + $0x510] sm:$0xff]
    %v228 = vld [vmem:[#allocation3 + $0x518] sm:$0xff]
    %v229 = vld [vmem:[#allocation3 + $0x520] sm:$0xff]
    %v230 = vld [vmem:[#allocation3 + $0x528] sm:$0xff]
    %v231 = vld [vmem:[#allocation3 + $0x530] sm:$0xff]
    %v232 = vld [vmem:[#allocation3 + $0x538] sm:$0xff]
    %v233 = vld [vmem:[#allocation3 + $0x540] sm:$0xff]
    %v234 = vld [vmem:[#allocation3 + $0x548] sm:$0xff]
    %v235 = vld [vmem:[#allocation3 + $0x550] sm:$0xff]
    %v236 = vld [vmem:[#allocation3 + $0x558] sm:$0xff]
    %v237 = vld [vmem:[#allocation3 + $0x560] sm:$0xff]
    %v238 = vld [vmem:[#allocation3 + $0x568] sm:$0xff]
    %v239 = vld [vmem:[#allocation3 + $0x570] sm:$0xff]
    %v240 = vld [vmem:[#allocation3 + $0x578] sm:$0xff]
    %v241 = vld [vmem:[#allocation3 + $0x580] sm:$0xff]
    %v242 = vld [vmem:[#allocation3 + $0x588] sm:$0xff]
    %v243 = vld [vmem:[#allocation3 + $0x590] sm:$0xff]
    %v244 = vld [vmem:[#allocation3 + $0x598] sm:$0xff]
    %v245 = vld [vmem:[#allocation3 + $0x5a0] sm:$0xff]
    %v246 = vld [vmem:[#allocation3 + $0x5a8] sm:$0xff]
    %v247 = vld [vmem:[#allocation3 + $0x5b0] sm:$0xff]
    %v248 = vld [vmem:[#allocation3 + $0x5b8] sm:$0xff]
    %v249 = vld [vmem:[#allocation3 + $0x5c0] sm:$0xff]
    %v250 = vld [vmem:[#allocation3 + $0x5c8] sm:$0xff]
    %v251 = vld [vmem:[#allocation3 + $0x5d0] sm:$0xff]
    %v252 = vld [vmem:[#allocation3 + $0x5d8] sm:$0xff]
    %v253 = vld [vmem:[#allocation3 + $0x5e0] sm:$0xff]
    %v254 = vld [vmem:[#allocation3 + $0x5e8] sm:$0xff]
    %v255 = vld [vmem:[#allocation3 + $0x5f0] sm:$0xff]
    %v256 = vld [vmem:[#allocation3 + $0x5f8] sm:$0xff]
    %v257 = vld [vmem:[#allocation3 + $0x600] sm:$0xff]
    %v258 = vld [vmem:[#allocation3 + $0x608] sm:$0xff]
    %v259 = vld [vmem:[#allocation3 + $0x610] sm:$0xff]
    %v260 = vld [vmem:[#allocation3 + $0x618] sm:$0xff]
    %v261 = vld [vmem:[#allocation3 + $0x620] sm:$0xff]
    %v262 = vld [vmem:[#allocation3 + $0x628] sm:$0xff]
    %v263 = vld [vmem:[#allocation3 + $0x630] sm:$0xff]
    %v264 = vld [vmem:[#allocation3 + $0x638] sm:$0xff]
    %v265 = vld [vmem:[#allocation3 + $0x640] sm:$0xff]
    %v266 = vld [vmem:[#allocation3 + $0x648] sm:$0xff]
    %v267 = vld [vmem:[#allocation3 + $0x650] sm:$0xff]
    %v268 = vld [vmem:[#allocation3 + $0x658] sm:$0xff]
    %v269 = vld [vmem:[#allocation3 + $0x660] sm:$0xff]
    %v270 = vld [vmem:[#allocation3 + $0x668] sm:$0xff]
    %v271 = vld [vmem:[#allocation3 + $0x670] sm:$0xff]
    %v272 = vld [vmem:[#allocation3 + $0x678] sm:$0xff]
    %v273 = vld [vmem:[#allocation3 + $0x680] sm:$0xff]
    %v274 = vld [vmem:[#allocation3 + $0x688] sm:$0xff]
    %v275 = vld [vmem:[#allocation3 + $0x690] sm:$0xff]
    %v276 = vld [vmem:[#allocation3 + $0x698] sm:$0xff]
    %v277 = vld [vmem:[#allocation3 + $0x6a0] sm:$0xff]
    %v278 = vld [vmem:[#allocation3 + $0x6a8] sm:$0xff]
    %v279 = vld [vmem:[#allocation3 + $0x6b0] sm:$0xff]
    %v280 = vld [vmem:[#allocation3 + $0x6b8] sm:$0xff]
    %v281 = vld [vmem:[#allocation3 + $0x6c0] sm:$0xff]
    %v282 = vld [vmem:[#allocation3 + $0x6c8] sm:$0xff]
    %v283 = vld [vmem:[#allocation3 + $0x6d0] sm:$0xff]
    %v284 = vld [vmem:[#allocation3 + $0x6d8] sm:$0xff]
    %v285 = vld [vmem:[#allocation3 + $0x6e0] sm:$0xff]
    %v286 = vld [vmem:[#allocation3 + $0x6e8] sm:$0xff]
    %v287 = vld [vmem:[#allocation3 + $0x6f0] sm:$0xff]
    %v288 = vld [vmem:[#allocation3 + $0x6f8] sm:$0xff]
    %v289 = vld [vmem:[#allocation3 + $0x700] sm:$0xff]
    %v290 = vld [vmem:[#allocation3 + $0x708] sm:$0xff]
    %v291 = vld [vmem:[#allocation3 + $0x710] sm:$0xff]
    %v292 = vld [vmem:[#allocation3 + $0x718] sm:$0xff]
    %v293 = vld [vmem:[#allocation3 + $0x720] sm:$0xff]
    %v294 = vld [vmem:[#allocation3 + $0x728] sm:$0xff]
    %v295 = vld [vmem:[#allocation3 + $0x730] sm:$0xff]
    %v296 = vld [vmem:[#allocation3 + $0x738] sm:$0xff]
    %v297 = vld [vmem:[#allocation3 + $0x740] sm:$0xff]
    %v298 = vld [vmem:[#allocation3 + $0x748] sm:$0xff]
    %v299 = vld [vmem:[#allocation3 + $0x750] sm:$0xff]
    %v300 = vld [vmem:[#allocation3 + $0x758] sm:$0xff]
    %v301 = vld [vmem:[#allocation3 + $0x760] sm:$0xff]
    %v302 = vld [vmem:[#allocation3 + $0x768] sm:$0xff]
    %v303 = vld [vmem:[#allocation3 + $0x770] sm:$0xff]
    %v304 = vld [vmem:[#allocation3 + $0x778] sm:$0xff]
    %v305 = vld [vmem:[#allocation3 + $0x780] sm:$0xff]
    %v306 = vld [vmem:[#allocation3 + $0x788] sm:$0xff]
    %v307 = vld [vmem:[#allocation3 + $0x790] sm:$0xff]
    %v308 = vld [vmem:[#allocation3 + $0x798] sm:$0xff]
    %v309 = vld [vmem:[#allocation3 + $0x7a0] sm:$0xff]
    %v310 = vld [vmem:[#allocation3 + $0x7a8] sm:$0xff]
    %v311 = vld [vmem:[#allocation3 + $0x7b0] sm:$0xff]
    %v312 = vld [vmem:[#allocation3 + $0x7b8] sm:$0xff]
    %v313 = vld [vmem:[#allocation3 + $0x7c0] sm:$0xff]
    %v314 = vld [vmem:[#allocation3 + $0x7c8] sm:$0xff]
    %v315 = vld [vmem:[#allocation3 + $0x7d0] sm:$0xff]
    %v316 = vld [vmem:[#allocation3 + $0x7d8] sm:$0xff]
    %v317 = vld [vmem:[#allocation3 + $0x7e0] sm:$0xff]
    %v318 = vld [vmem:[#allocation3 + $0x7e8] sm:$0xff]
    %v319 = vld [vmem:[#allocation3 + $0x7f0] sm:$0xff]
    %v320 = vld [vmem:[#allocation3 + $0x7f8] sm:$0xff]
    %v321 = vld [vmem:[#allocation6] sm:$0xff]
    %v322 = vld [vmem:[#allocation6 + $0x8] sm:$0xff]
    %v323 = vld [vmem:[#allocation6 + $0x10] sm:$0xff]
    %v324 = vld [vmem:[#allocation6 + $0x18] sm:$0xff]
    %v325 = vld [vmem:[#allocation6 + $0x20] sm:$0xff]
    %v326 = vld [vmem:[#allocation6 + $0x28] sm:$0xff]
    %v327 = vld [vmem:[#allocation6 + $0x30] sm:$0xff]
    %v328 = vld [vmem:[#allocation6 + $0x38] sm:$0xff]
    %v329 = vld [vmem:[#allocation6 + $0x40] sm:$0xff]
    %v330 = vld [vmem:[#allocation6 + $0x48] sm:$0xff]
    %v331 = vld [vmem:[#allocation6 + $0x50] sm:$0xff]
    %v332 = vld [vmem:[#allocation6 + $0x58] sm:$0xff]
    %v333 = vld [vmem:[#allocation6 + $0x60] sm:$0xff]
    %v334 = vld [vmem:[#allocation6 + $0x68] sm:$0xff]
    %v335 = vld [vmem:[#allocation6 + $0x70] sm:$0xff]
    %v336 = vld [vmem:[#allocation6 + $0x78] sm:$0xff]
    %v337 = vld [vmem:[#allocation6 + $0x80] sm:$0xff]
    %v338 = vld [vmem:[#allocation6 + $0x88] sm:$0xff]
    %v339 = vld [vmem:[#allocation6 + $0x90] sm:$0xff]
    %v340 = vld [vmem:[#allocation6 + $0x98] sm:$0xff]
    %v341 = vld [vmem:[#allocation6 + $0xa0] sm:$0xff]
    %v342 = vld [vmem:[#allocation6 + $0xa8] sm:$0xff]
    %v343 = vld [vmem:[#allocation6 + $0xb0] sm:$0xff]
    %v344 = vld [vmem:[#allocation6 + $0xb8] sm:$0xff]
    %v345 = vld [vmem:[#allocation6 + $0xc0] sm:$0xff]
    %v346 = vld [vmem:[#allocation6 + $0xc8] sm:$0xff]
    %v347 = vld [vmem:[#allocation6 + $0xd0] sm:$0xff]
    %v348 = vld [vmem:[#allocation6 + $0xd8] sm:$0xff]
    %v349 = vld [vmem:[#allocation6 + $0xe0] sm:$0xff]
    %v350 = vld [vmem:[#allocation6 + $0xe8] sm:$0xff]
    %v351 = vld [vmem:[#allocation6 + $0xf0] sm:$0xff]
    %v352 = vld [vmem:[#allocation6 + $0xf8] sm:$0xff]
    %v353 = vld [vmem:[#allocation6 + $0x100] sm:$0xff]
    %v354 = vld [vmem:[#allocation6 + $0x108] sm:$0xff]
    %v355 = vld [vmem:[#allocation6 + $0x110] sm:$0xff]
    %v356 = vld [vmem:[#allocation6 + $0x118] sm:$0xff]
    %v357 = vld [vmem:[#allocation6 + $0x120] sm:$0xff]
    %v358 = vld [vmem:[#allocation6 + $0x128] sm:$0xff]
    %v359 = vld [vmem:[#allocation6 + $0x130] sm:$0xff]
    %v360 = vld [vmem:[#allocation6 + $0x138] sm:$0xff]
    %v361 = vld [vmem:[#allocation6 + $0x140] sm:$0xff]
    %v362 = vld [vmem:[#allocation6 + $0x148] sm:$0xff]
    %v363 = vld [vmem:[#allocation6 + $0x150] sm:$0xff]
    %v364 = vld [vmem:[#allocation6 + $0x158] sm:$0xff]
    %v365 = vld [vmem:[#allocation6 + $0x160] sm:$0xff]
    %v366 = vld [vmem:[#allocation6 + $0x168] sm:$0xff]
    %v367 = vld [vmem:[#allocation6 + $0x170] sm:$0xff]
    %v368 = vld [vmem:[#allocation6 + $0x178] sm:$0xff]
    %v369 = vld [vmem:[#allocation6 + $0x180] sm:$0xff]
    %v370 = vld [vmem:[#allocation6 + $0x188] sm:$0xff]
    %v371 = vld [vmem:[#allocation6 + $0x190] sm:$0xff]
    %v372 = vld [vmem:[#allocation6 + $0x198] sm:$0xff]
    %v373 = vld [vmem:[#allocation6 + $0x1a0] sm:$0xff]
    %v374 = vld [vmem:[#allocation6 + $0x1a8] sm:$0xff]
    %v375 = vld [vmem:[#allocation6 + $0x1b0] sm:$0xff]
    %v376 = vld [vmem:[#allocation6 + $0x1b8] sm:$0xff]
    %v377 = vld [vmem:[#allocation6 + $0x1c0] sm:$0xff]
    %v378 = vld [vmem:[#allocation6 + $0x1c8] sm:$0xff]
    %v379 = vld [vmem:[#allocation6 + $0x1d0] sm:$0xff]
    %v380 = vld [vmem:[#allocation6 + $0x1d8] sm:$0xff]
    %v381 = vld [vmem:[#allocation6 + $0x1e0] sm:$0xff]
    %v382 = vld [vmem:[#allocation6 + $0x1e8] sm:$0xff]
    %v383 = vld [vmem:[#allocation6 + $0x1f0] sm:$0xff]
    %v384 = vld [vmem:[#allocation6 + $0x1f8] sm:$0xff]
    %v385 = vld [vmem:[#allocation6 + $0x200] sm:$0xff]
    %v386 = vld [vmem:[#allocation6 + $0x208] sm:$0xff]
    %v387 = vld [vmem:[#allocation6 + $0x210] sm:$0xff]
    %v388 = vld [vmem:[#allocation6 + $0x218] sm:$0xff]
    %v389 = vld [vmem:[#allocation6 + $0x220] sm:$0xff]
    %v390 = vld [vmem:[#allocation6 + $0x228] sm:$0xff]
    %v391 = vld [vmem:[#allocation6 + $0x230] sm:$0xff]
    %v392 = vld [vmem:[#allocation6 + $0x238] sm:$0xff]
    %v393 = vld [vmem:[#allocation6 + $0x240] sm:$0xff]
    %v394 = vld [vmem:[#allocation6 + $0x248] sm:$0xff]
    %v395 = vld [vmem:[#allocation6 + $0x250] sm:$0xff]
    %v396 = vld [vmem:[#allocation6 + $0x258] sm:$0xff]
    %v397 = vld [vmem:[#allocation6 + $0x260] sm:$0xff]
    %v398 = vld [vmem:[#allocation6 + $0x268] sm:$0xff]
    %v399 = vld [vmem:[#allocation6 + $0x270] sm:$0xff]
    %v400 = vld [vmem:[#allocation6 + $0x278] sm:$0xff]
    %v401 = vld [vmem:[#allocation6 + $0x280] sm:$0xff]
    %v402 = vld [vmem:[#allocation6 + $0x288] sm:$0xff]
    %v403 = vld [vmem:[#allocation6 + $0x290] sm:$0xff]
    %v404 = vld [vmem:[#allocation6 + $0x298] sm:$0xff]
    %v405 = vld [vmem:[#allocation6 + $0x2a0] sm:$0xff]
    %v406 = vld [vmem:[#allocation6 + $0x2a8] sm:$0xff]
    %v407 = vld [vmem:[#allocation6 + $0x2b0] sm:$0xff]
    %v408 = vld [vmem:[#allocation6 + $0x2b8] sm:$0xff]
    %v409 = vld [vmem:[#allocation6 + $0x2c0] sm:$0xff]
    %v410 = vld [vmem:[#allocation6 + $0x2c8] sm:$0xff]
    %v411 = vld [vmem:[#allocation6 + $0x2d0] sm:$0xff]
    %v412 = vld [vmem:[#allocation6 + $0x2d8] sm:$0xff]
    %v413 = vld [vmem:[#allocation6 + $0x2e0] sm:$0xff]
    %v414 = vld [vmem:[#allocation6 + $0x2e8] sm:$0xff]
    %v415 = vld [vmem:[#allocation6 + $0x2f0] sm:$0xff]
    %v416 = vld [vmem:[#allocation6 + $0x2f8] sm:$0xff]
    %v417 = vld [vmem:[#allocation6 + $0x300] sm:$0xff]
    %v418 = vld [vmem:[#allocation6 + $0x308] sm:$0xff]
    %v419 = vld [vmem:[#allocation6 + $0x310] sm:$0xff]
    %v420 = vld [vmem:[#allocation6 + $0x318] sm:$0xff]
    %v421 = vld [vmem:[#allocation6 + $0x320] sm:$0xff]
    %v422 = vld [vmem:[#allocation6 + $0x328] sm:$0xff]
    %v423 = vld [vmem:[#allocation6 + $0x330] sm:$0xff]
    %v424 = vld [vmem:[#allocation6 + $0x338] sm:$0xff]
    %v425 = vld [vmem:[#allocation6 + $0x340] sm:$0xff]
    %v426 = vld [vmem:[#allocation6 + $0x348] sm:$0xff]
    %v427 = vld [vmem:[#allocation6 + $0x350] sm:$0xff]
    %v428 = vld [vmem:[#allocation6 + $0x358] sm:$0xff]
    %v429 = vld [vmem:[#allocation6 + $0x360] sm:$0xff]
    %v430 = vld [vmem:[#allocation6 + $0x368] sm:$0xff]
    %v431 = vld [vmem:[#allocation6 + $0x370] sm:$0xff]
    %v432 = vld [vmem:[#allocation6 + $0x378] sm:$0xff]
    %v433 = vld [vmem:[#allocation6 + $0x380] sm:$0xff]
    %v434 = vld [vmem:[#allocation6 + $0x388] sm:$0xff]
    %v435 = vld [vmem:[#allocation6 + $0x390] sm:$0xff]
    %v436 = vld [vmem:[#allocation6 + $0x398] sm:$0xff]
    %v437 = vld [vmem:[#allocation6 + $0x3a0] sm:$0xff]
    %v438 = vld [vmem:[#allocation6 + $0x3a8] sm:$0xff]
    %v439 = vld [vmem:[#allocation6 + $0x3b0] sm:$0xff]
    %v440 = vld [vmem:[#allocation6 + $0x3b8] sm:$0xff]
    %v441 = vld [vmem:[#allocation6 + $0x3c0] sm:$0xff]
    %v442 = vld [vmem:[#allocation6 + $0x3c8] sm:$0xff]
    %v443 = vld [vmem:[#allocation6 + $0x3d0] sm:$0xff]
    %v444 = vld [vmem:[#allocation6 + $0x3d8] sm:$0xff]
    %v445 = vld [vmem:[#allocation6 + $0x3e0] sm:$0xff]
    %v446 = vld [vmem:[#allocation6 + $0x3e8] sm:$0xff]
    %v447 = vld [vmem:[#allocation6 + $0x3f0] sm:$0xff]
    %v448 = vld [vmem:[#allocation6 + $0x3f8] sm:$0xff]
    %v449 = vld [vmem:[#allocation6 + $0x400] sm:$0xff]
    %v450 = vld [vmem:[#allocation6 + $0x408] sm:$0xff]
    %v451 = vld [vmem:[#allocation6 + $0x410] sm:$0xff]
    %v452 = vld [vmem:[#allocation6 + $0x418] sm:$0xff]
    %v453 = vld [vmem:[#allocation6 + $0x420] sm:$0xff]
    %v454 = vld [vmem:[#allocation6 + $0x428] sm:$0xff]
    %v455 = vld [vmem:[#allocation6 + $0x430] sm:$0xff]
    %v456 = vld [vmem:[#allocation6 + $0x438] sm:$0xff]
    %v457 = vld [vmem:[#allocation6 + $0x440] sm:$0xff]
    %v458 = vld [vmem:[#allocation6 + $0x448] sm:$0xff]
    %v459 = vld [vmem:[#allocation6 + $0x450] sm:$0xff]
    %v460 = vld [vmem:[#allocation6 + $0x458] sm:$0xff]
    %v461 = vld [vmem:[#allocation6 + $0x460] sm:$0xff]
    %v462 = vld [vmem:[#allocation6 + $0x468] sm:$0xff]
    %v463 = vld [vmem:[#allocation6 + $0x470] sm:$0xff]
    %v464 = vld [vmem:[#allocation6 + $0x478] sm:$0xff]
    %v465 = vld [vmem:[#allocation6 + $0x480] sm:$0xff]
    %v466 = vld [vmem:[#allocation6 + $0x488] sm:$0xff]
    %v467 = vld [vmem:[#allocation6 + $0x490] sm:$0xff]
    %v468 = vld [vmem:[#allocation6 + $0x498] sm:$0xff]
    %v469 = vld [vmem:[#allocation6 + $0x4a0] sm:$0xff]
    %v470 = vld [vmem:[#allocation6 + $0x4a8] sm:$0xff]
    %v471 = vld [vmem:[#allocation6 + $0x4b0] sm:$0xff]
    %v472 = vld [vmem:[#allocation6 + $0x4b8] sm:$0xff]
    %v473 = vld [vmem:[#allocation6 + $0x4c0] sm:$0xff]
    %v474 = vld [vmem:[#allocation6 + $0x4c8] sm:$0xff]
    %v475 = vld [vmem:[#allocation6 + $0x4d0] sm:$0xff]
    %v476 = vld [vmem:[#allocation6 + $0x4d8] sm:$0xff]
    %v477 = vld [vmem:[#allocation6 + $0x4e0] sm:$0xff]
    %v478 = vld [vmem:[#allocation6 + $0x4e8] sm:$0xff]
    %v479 = vld [vmem:[#allocation6 + $0x4f0] sm:$0xff]
    %v480 = vld [vmem:[#allocation6 + $0x4f8] sm:$0xff]
    %v481 = vld [vmem:[#allocation6 + $0x500] sm:$0xff]
    %v482 = vld [vmem:[#allocation6 + $0x508] sm:$0xff]
    %v483 = vld [vmem:[#allocation6 + $0x510] sm:$0xff]
    %v484 = vld [vmem:[#allocation6 + $0x518] sm:$0xff]
    %v485 = vld [vmem:[#allocation6 + $0x520] sm:$0xff]
    %v486 = vld [vmem:[#allocation6 + $0x528] sm:$0xff]
    %v487 = vld [vmem:[#allocation6 + $0x530] sm:$0xff]
    %v488 = vld [vmem:[#allocation6 + $0x538] sm:$0xff]
    %v489 = vld [vmem:[#allocation6 + $0x540] sm:$0xff]
    %v490 = vld [vmem:[#allocation6 + $0x548] sm:$0xff]
    %v491 = vld [vmem:[#allocation6 + $0x550] sm:$0xff]
    %v492 = vld [vmem:[#allocation6 + $0x558] sm:$0xff]
    %v493 = vld [vmem:[#allocation6 + $0x560] sm:$0xff]
    %v494 = vld [vmem:[#allocation6 + $0x568] sm:$0xff]
    %v495 = vld [vmem:[#allocation6 + $0x570] sm:$0xff]
    %v496 = vld [vmem:[#allocation6 + $0x578] sm:$0xff]
    %v497 = vld [vmem:[#allocation6 + $0x580] sm:$0xff]
    %v498 = vld [vmem:[#allocation6 + $0x588] sm:$0xff]
    %v499 = vld [vmem:[#allocation6 + $0x590] sm:$0xff]
    %v500 = vld [vmem:[#allocation6 + $0x598] sm:$0xff]
    %v501 = vld [vmem:[#allocation6 + $0x5a0] sm:$0xff]
    %v502 = vld [vmem:[#allocation6 + $0x5a8] sm:$0xff]
    %v503 = vld [vmem:[#allocation6 + $0x5b0] sm:$0xff]
    %v504 = vld [vmem:[#allocation6 + $0x5b8] sm:$0xff]
    %v505 = vld [vmem:[#allocation6 + $0x5c0] sm:$0xff]
    %v506 = vld [vmem:[#allocation6 + $0x5c8] sm:$0xff]
    %v507 = vld [vmem:[#allocation6 + $0x5d0] sm:$0xff]
    %v508 = vld [vmem:[#allocation6 + $0x5d8] sm:$0xff]
    %v509 = vld [vmem:[#allocation6 + $0x5e0] sm:$0xff]
    %v510 = vld [vmem:[#allocation6 + $0x5e8] sm:$0xff]
    %v511 = vld [vmem:[#allocation6 + $0x5f0] sm:$0xff]
    %v512 = vld [vmem:[#allocation6 + $0x5f8] sm:$0xff]
    %v513 = vld [vmem:[#allocation6 + $0x600] sm:$0xff]
    %v514 = vld [vmem:[#allocation6 + $0x608] sm:$0xff]
    %v515 = vld [vmem:[#allocation6 + $0x610] sm:$0xff]
    %v516 = vld [vmem:[#allocation6 + $0x618] sm:$0xff]
    %v517 = vld [vmem:[#allocation6 + $0x620] sm:$0xff]
    %v518 = vld [vmem:[#allocation6 + $0x628] sm:$0xff]
    %v519 = vld [vmem:[#allocation6 + $0x630] sm:$0xff]
    %v520 = vld [vmem:[#allocation6 + $0x638] sm:$0xff]
    %v521 = vld [vmem:[#allocation6 + $0x640] sm:$0xff]
    %v522 = vld [vmem:[#allocation6 + $0x648] sm:$0xff]
    %v523 = vld [vmem:[#allocation6 + $0x650] sm:$0xff]
    %v524 = vld [vmem:[#allocation6 + $0x658] sm:$0xff]
    %v525 = vld [vmem:[#allocation6 + $0x660] sm:$0xff]
    %v526 = vld [vmem:[#allocation6 + $0x668] sm:$0xff]
    %v527 = vld [vmem:[#allocation6 + $0x670] sm:$0xff]
    %v528 = vld [vmem:[#allocation6 + $0x678] sm:$0xff]
    %v529 = vld [vmem:[#allocation6 + $0x680] sm:$0xff]
    %v530 = vld [vmem:[#allocation6 + $0x688] sm:$0xff]
    %v531 = vld [vmem:[#allocation6 + $0x690] sm:$0xff]
    %v532 = vld [vmem:[#allocation6 + $0x698] sm:$0xff]
    %v533 = vld [vmem:[#allocation6 + $0x6a0] sm:$0xff]
    %v534 = vld [vmem:[#allocation6 + $0x6a8] sm:$0xff]
    %v535 = vld [vmem:[#allocation6 + $0x6b0] sm:$0xff]
    %v536 = vld [vmem:[#allocation6 + $0x6b8] sm:$0xff]
    %v537 = vld [vmem:[#allocation6 + $0x6c0] sm:$0xff]
    %v538 = vld [vmem:[#allocation6 + $0x6c8] sm:$0xff]
    %v539 = vld [vmem:[#allocation6 + $0x6d0] sm:$0xff]
    %v540 = vld [vmem:[#allocation6 + $0x6d8] sm:$0xff]
    %v541 = vld [vmem:[#allocation6 + $0x6e0] sm:$0xff]
    %v542 = vld [vmem:[#allocation6 + $0x6e8] sm:$0xff]
    %v543 = vld [vmem:[#allocation6 + $0x6f0] sm:$0xff]
    %v544 = vld [vmem:[#allocation6 + $0x6f8] sm:$0xff]
    %v545 = vld [vmem:[#allocation6 + $0x700] sm:$0xff]
    %v546 = vld [vmem:[#allocation6 + $0x708] sm:$0xff]
    %v547 = vld [vmem:[#allocation6 + $0x710] sm:$0xff]
    %v548 = vld [vmem:[#allocation6 + $0x718] sm:$0xff]
    %v549 = vld [vmem:[#allocation6 + $0x720] sm:$0xff]
    %v550 = vld [vmem:[#allocation6 + $0x728] sm:$0xff]
    %v551 = vld [vmem:[#allocation6 + $0x730] sm:$0xff]
    %v552 = vld [vmem:[#allocation6 + $0x738] sm:$0xff]
    %v553 = vld [vmem:[#allocation6 + $0x740] sm:$0xff]
    %v554 = vld [vmem:[#allocation6 + $0x748] sm:$0xff]
    %v555 = vld [vmem:[#allocation6 + $0x750] sm:$0xff]
    %v556 = vld [vmem:[#allocation6 + $0x758] sm:$0xff]
    %v557 = vld [vmem:[#allocation6 + $0x760] sm:$0xff]
    %v558 = vld [vmem:[#allocation6 + $0x768] sm:$0xff]
    %v559 = vld [vmem:[#allocation6 + $0x770] sm:$0xff]
    %v560 = vld [vmem:[#allocation6 + $0x778] sm:$0xff]
    %v561 = vld [vmem:[#allocation6 + $0x780] sm:$0xff]
    %v562 = vld [vmem:[#allocation6 + $0x788] sm:$0xff]
    %v563 = vld [vmem:[#allocation6 + $0x790] sm:$0xff]
    %v564 = vld [vmem:[#allocation6 + $0x798] sm:$0xff]
    %v565 = vld [vmem:[#allocation6 + $0x7a0] sm:$0xff]
    %v566 = vld [vmem:[#allocation6 + $0x7a8] sm:$0xff]
    %v567 = vld [vmem:[#allocation6 + $0x7b0] sm:$0xff]
    %v568 = vld [vmem:[#allocation6 + $0x7b8] sm:$0xff]
    %v569 = vld [vmem:[#allocation6 + $0x7c0] sm:$0xff]
    %v570 = vld [vmem:[#allocation6 + $0x7c8] sm:$0xff]
    %v571 = vld [vmem:[#allocation6 + $0x7d0] sm:$0xff]
    %v572 = vld [vmem:[#allocation6 + $0x7d8] sm:$0xff]
    %v573 = vld [vmem:[#allocation6 + $0x7e0] sm:$0xff]
    %v574 = vld [vmem:[#allocation6 + $0x7e8] sm:$0xff]
    %v575 = vld [vmem:[#allocation6 + $0x7f0] sm:$0xff]
    %v576 = vld [vmem:[#allocation6 + $0x7f8] sm:$0xff]
    %v577 = vsub.f32 %v65, %v321
    %v578 = vsub.f32 %v66, %v322
    %v579 = vsub.f32 %v67, %v323
    %v580 = vsub.f32 %v68, %v324
    %v581 = vsub.f32 %v69, %v325
    %v582 = vsub.f32 %v70, %v326
    %v583 = vsub.f32 %v71, %v327
    %v584 = vsub.f32 %v72, %v328
    %v585 = vsub.f32 %v73, %v329
    %v586 = vsub.f32 %v74, %v330
    %v587 = vsub.f32 %v75, %v331
    %v588 = vsub.f32 %v76, %v332
    %v589 = vsub.f32 %v77, %v333
    %v590 = vsub.f32 %v78, %v334
    %v591 = vsub.f32 %v79, %v335
    %v592 = vsub.f32 %v80, %v336
    %v593 = vsub.f32 %v81, %v337
    %v594 = vsub.f32 %v82, %v338
    %v595 = vsub.f32 %v83, %v339
    %v596 = vsub.f32 %v84, %v340
    %v597 = vsub.f32 %v85, %v341
    %v598 = vsub.f32 %v86, %v342
    %v599 = vsub.f32 %v87, %v343
    %v600 = vsub.f32 %v88, %v344
    %v601 = vsub.f32 %v89, %v345
    %v602 = vsub.f32 %v90, %v346
    %v603 = vsub.f32 %v91, %v347
    %v604 = vsub.f32 %v92, %v348
    %v605 = vsub.f32 %v93, %v349
    %v606 = vsub.f32 %v94, %v350
    %v607 = vsub.f32 %v95, %v351
    %v608 = vsub.f32 %v96, %v352
    %v609 = vsub.f32 %v97, %v353
    %v610 = vsub.f32 %v98, %v354
    %v611 = vsub.f32 %v99, %v355
    %v612 = vsub.f32 %v100, %v356
    %v613 = vsub.f32 %v101, %v357
    %v614 = vsub.f32 %v102, %v358
    %v615 = vsub.f32 %v103, %v359
    %v616 = vsub.f32 %v104, %v360
    %v617 = vsub.f32 %v105, %v361
    %v618 = vsub.f32 %v106, %v362
    %v619 = vsub.f32 %v107, %v363
    %v620 = vsub.f32 %v108, %v364
    %v621 = vsub.f32 %v109, %v365
    %v622 = vsub.f32 %v110, %v366
    %v623 = vsub.f32 %v111, %v367
    %v624 = vsub.f32 %v112, %v368
    %v625 = vsub.f32 %v113, %v369
    %v626 = vsub.f32 %v114, %v370
    %v627 = vsub.f32 %v115, %v371
    %v628 = vsub.f32 %v116, %v372
    %v629 = vsub.f32 %v117, %v373
    %v630 = vsub.f32 %v118, %v374
    %v631 = vsub.f32 %v119, %v375
    %v632 = vsub.f32 %v120, %v376
    %v633 = vsub.f32 %v121, %v377
    %v634 = vsub.f32 %v122, %v378
    %v635 = vsub.f32 %v123, %v379
    %v636 = vsub.f32 %v124, %v380
    %v637 = vsub.f32 %v125, %v381
    %v638 = vsub.f32 %v126, %v382
    %v639 = vsub.f32 %v127, %v383
    %v640 = vsub.f32 %v128, %v384
    %v641 = vsub.f32 %v129, %v385
    %v642 = vsub.f32 %v130, %v386
    %v643 = vsub.f32 %v131, %v387
    %v644 = vsub.f32 %v132, %v388
    %v645 = vsub.f32 %v133, %v389
    %v646 = vsub.f32 %v134, %v390
    %v647 = vsub.f32 %v135, %v391
    %v648 = vsub.f32 %v136, %v392
    %v649 = vsub.f32 %v137, %v393
    %v650 = vsub.f32 %v138, %v394
    %v651 = vsub.f32 %v139, %v395
    %v652 = vsub.f32 %v140, %v396
    %v653 = vsub.f32 %v141, %v397
    %v654 = vsub.f32 %v142, %v398
    %v655 = vsub.f32 %v143, %v399
    %v656 = vsub.f32 %v144, %v400
    %v657 = vsub.f32 %v145, %v401
    %v658 = vsub.f32 %v146, %v402
    %v659 = vsub.f32 %v147, %v403
    %v660 = vsub.f32 %v148, %v404
    %v661 = vsub.f32 %v149, %v405
    %v662 = vsub.f32 %v150, %v406
    %v663 = vsub.f32 %v151, %v407
    %v664 = vsub.f32 %v152, %v408
    %v665 = vsub.f32 %v153, %v409
    %v666 = vsub.f32 %v154, %v410
    %v667 = vsub.f32 %v155, %v411
    %v668 = vsub.f32 %v156, %v412
    %v669 = vsub.f32 %v157, %v413
    %v670 = vsub.f32 %v158, %v414
    %v671 = vsub.f32 %v159, %v415
    %v672 = vsub.f32 %v160, %v416
    %v673 = vsub.f32 %v161, %v417
    %v674 = vsub.f32 %v162, %v418
    %v675 = vsub.f32 %v163, %v419
    %v676 = vsub.f32 %v164, %v420
    %v677 = vsub.f32 %v165, %v421
    %v678 = vsub.f32 %v166, %v422
    %v679 = vsub.f32 %v167, %v423
    %v680 = vsub.f32 %v168, %v424
    %v681 = vsub.f32 %v169, %v425
    %v682 = vsub.f32 %v170, %v426
    %v683 = vsub.f32 %v171, %v427
    %v684 = vsub.f32 %v172, %v428
    %v685 = vsub.f32 %v173, %v429
    %v686 = vsub.f32 %v174, %v430
    %v687 = vsub.f32 %v175, %v431
    %v688 = vsub.f32 %v176, %v432
    %v689 = vsub.f32 %v177, %v433
    %v690 = vsub.f32 %v178, %v434
    %v691 = vsub.f32 %v179, %v435
    %v692 = vsub.f32 %v180, %v436
    %v693 = vsub.f32 %v181, %v437
    %v694 = vsub.f32 %v182, %v438
    %v695 = vsub.f32 %v183, %v439
    %v696 = vsub.f32 %v184, %v440
    %v697 = vsub.f32 %v185, %v441
    %v698 = vsub.f32 %v186, %v442
    %v699 = vsub.f32 %v187, %v443
    %v700 = vsub.f32 %v188, %v444
    %v701 = vsub.f32 %v189, %v445
    %v702 = vsub.f32 %v190, %v446
    %v703 = vsub.f32 %v191, %v447
    %v704 = vsub.f32 %v192, %v448
    %v705 = vsub.f32 %v193, %v449
    %v706 = vsub.f32 %v194, %v450
    %v707 = vsub.f32 %v195, %v451
    %v708 = vsub.f32 %v196, %v452
    %v709 = vsub.f32 %v197, %v453
    %v710 = vsub.f32 %v198, %v454
    %v711 = vsub.f32 %v199, %v455
    %v712 = vsub.f32 %v200, %v456
    %v713 = vsub.f32 %v201, %v457
    %v714 = vsub.f32 %v202, %v458
    %v715 = vsub.f32 %v203, %v459
    %v716 = vsub.f32 %v204, %v460
    %v717 = vsub.f32 %v205, %v461
    %v718 = vsub.f32 %v206, %v462
    %v719 = vsub.f32 %v207, %v463
    %v720 = vsub.f32 %v208, %v464
    %v721 = vsub.f32 %v209, %v465
    %v722 = vsub.f32 %v210, %v466
    %v723 = vsub.f32 %v211, %v467
    %v724 = vsub.f32 %v212, %v468
    %v725 = vsub.f32 %v213, %v469
    %v726 = vsub.f32 %v214, %v470
    %v727 = vsub.f32 %v215, %v471
    %v728 = vsub.f32 %v216, %v472
    %v729 = vsub.f32 %v217, %v473
    %v730 = vsub.f32 %v218, %v474
    %v731 = vsub.f32 %v219, %v475
    %v732 = vsub.f32 %v220, %v476
    %v733 = vsub.f32 %v221, %v477
    %v734 = vsub.f32 %v222, %v478
    %v735 = vsub.f32 %v223, %v479
    %v736 = vsub.f32 %v224, %v480
    %v737 = vsub.f32 %v225, %v481
    %v738 = vsub.f32 %v226, %v482
    %v739 = vsub.f32 %v227, %v483
    %v740 = vsub.f32 %v228, %v484
    %v741 = vsub.f32 %v229, %v485
    %v742 = vsub.f32 %v230, %v486
    %v743 = vsub.f32 %v231, %v487
    %v744 = vsub.f32 %v232, %v488
    %v745 = vsub.f32 %v233, %v489
    %v746 = vsub.f32 %v234, %v490
    %v747 = vsub.f32 %v235, %v491
    %v748 = vsub.f32 %v236, %v492
    %v749 = vsub.f32 %v237, %v493
    %v750 = vsub.f32 %v238, %v494
    %v751 = vsub.f32 %v239, %v495
    %v752 = vsub.f32 %v240, %v496
    %v753 = vsub.f32 %v241, %v497
    %v754 = vsub.f32 %v242, %v498
    %v755 = vsub.f32 %v243, %v499
    %v756 = vsub.f32 %v244, %v500
    %v757 = vsub.f32 %v245, %v501
    %v758 = vsub.f32 %v246, %v502
    %v759 = vsub.f32 %v247, %v503
    %v760 = vsub.f32 %v248, %v504
    %v761 = vsub.f32 %v249, %v505
    %v762 = vsub.f32 %v250, %v506
    %v763 = vsub.f32 %v251, %v507
    %v764 = vsub.f32 %v252, %v508
    %v765 = vsub.f32 %v253, %v509
    %v766 = vsub.f32 %v254, %v510
    %v767 = vsub.f32 %v255, %v511
    %v768 = vsub.f32 %v256, %v512
    %v769 = vsub.f32 %v257, %v513
    %v770 = vsub.f32 %v258, %v514
    %v771 = vsub.f32 %v259, %v515
    %v772 = vsub.f32 %v260, %v516
    %v773 = vsub.f32 %v261, %v517
    %v774 = vsub.f32 %v262, %v518
    %v775 = vsub.f32 %v263, %v519
    %v776 = vsub.f32 %v264, %v520
    %v777 = vsub.f32 %v265, %v521
    %v778 = vsub.f32 %v266, %v522
    %v779 = vsub.f32 %v267, %v523
    %v780 = vsub.f32 %v268, %v524
    %v781 = vsub.f32 %v269, %v525
    %v782 = vsub.f32 %v270, %v526
    %v783 = vsub.f32 %v271, %v527
    %v784 = vsub.f32 %v272, %v528
    %v785 = vsub.f32 %v273, %v529
    %v786 = vsub.f32 %v274, %v530
    %v787 = vsub.f32 %v275, %v531
    %v788 = vsub.f32 %v276, %v532
    %v789 = vsub.f32 %v277, %v533
    %v790 = vsub.f32 %v278, %v534
    %v791 = vsub.f32 %v279, %v535
    %v792 = vsub.f32 %v280, %v536
    %v793 = vsub.f32 %v281, %v537
    %v794 = vsub.f32 %v282, %v538
    %v795 = vsub.f32 %v283, %v539
    %v796 = vsub.f32 %v284, %v540
    %v797 = vsub.f32 %v285, %v541
    %v798 = vsub.f32 %v286, %v542
    %v799 = vsub.f32 %v287, %v543
    %v800 = vsub.f32 %v288, %v544
    %v801 = vsub.f32 %v289, %v545
    %v802 = vsub.f32 %v290, %v546
    %v803 = vsub.f32 %v291, %v547
    %v804 = vsub.f32 %v292, %v548
    %v805 = vsub.f32 %v293, %v549
    %v806 = vsub.f32 %v294, %v550
    %v807 = vsub.f32 %v295, %v551
    %v808 = vsub.f32 %v296, %v552
    %v809 = vsub.f32 %v297, %v553
    %v810 = vsub.f32 %v298, %v554
    %v811 = vsub.f32 %v299, %v555
    %v812 = vsub.f32 %v300, %v556
    %v813 = vsub.f32 %v301, %v557
    %v814 = vsub.f32 %v302, %v558
    %v815 = vsub.f32 %v303, %v559
    %v816 = vsub.f32 %v304, %v560
    %v817 = vsub.f32 %v305, %v561
    %v818 = vsub.f32 %v306, %v562
    %v819 = vsub.f32 %v307, %v563
    %v820 = vsub.f32 %v308, %v564
    %v821 = vsub.f32 %v309, %v565
    %v822 = vsub.f32 %v310, %v566
    %v823 = vsub.f32 %v311, %v567
    %v824 = vsub.f32 %v312, %v568
    %v825 = vsub.f32 %v313, %v569
    %v826 = vsub.f32 %v314, %v570
    %v827 = vsub.f32 %v315, %v571
    %v828 = vsub.f32 %v316, %v572
    %v829 = vsub.f32 %v317, %v573
    %v830 = vsub.f32 %v318, %v574
    %v831 = vsub.f32 %v319, %v575
    %v832 = vsub.f32 %v320, %v576
    %v833 = vmul.f32 %v577, %v577
    %v834 = vmul.f32 %v578, %v578
    %v835 = vmul.f32 %v579, %v579
    %v836 = vmul.f32 %v580, %v580
    %v837 = vmul.f32 %v581, %v581
    %v838 = vmul.f32 %v582, %v582
    %v839 = vmul.f32 %v583, %v583
    %v840 = vmul.f32 %v584, %v584
    %v841 = vmul.f32 %v585, %v585
    %v842 = vmul.f32 %v586, %v586
    %v843 = vmul.f32 %v587, %v587
    %v844 = vmul.f32 %v588, %v588
    %v845 = vmul.f32 %v589, %v589
    %v846 = vmul.f32 %v590, %v590
    %v847 = vmul.f32 %v591, %v591
    %v848 = vmul.f32 %v592, %v592
    %v849 = vmul.f32 %v593, %v593
    %v850 = vmul.f32 %v594, %v594
    %v851 = vmul.f32 %v595, %v595
    %v852 = vmul.f32 %v596, %v596
    %v853 = vmul.f32 %v597, %v597
    %v854 = vmul.f32 %v598, %v598
    %v855 = vmul.f32 %v599, %v599
    %v856 = vmul.f32 %v600, %v600
    %v857 = vmul.f32 %v601, %v601
    %v858 = vmul.f32 %v602, %v602
    %v859 = vmul.f32 %v603, %v603
    %v860 = vmul.f32 %v604, %v604
    %v861 = vmul.f32 %v605, %v605
    %v862 = vmul.f32 %v606, %v606
    %v863 = vmul.f32 %v607, %v607
    %v864 = vmul.f32 %v608, %v608
    %v865 = vmul.f32 %v609, %v609
    %v866 = vmul.f32 %v610, %v610
    %v867 = vmul.f32 %v611, %v611
    %v868 = vmul.f32 %v612, %v612
    %v869 = vmul.f32 %v613, %v613
    %v870 = vmul.f32 %v614, %v614
    %v871 = vmul.f32 %v615, %v615
    %v872 = vmul.f32 %v616, %v616
    %v873 = vmul.f32 %v617, %v617
    %v874 = vmul.f32 %v618, %v618
    %v875 = vmul.f32 %v619, %v619
    %v876 = vmul.f32 %v620, %v620
    %v877 = vmul.f32 %v621, %v621
    %v878 = vmul.f32 %v622, %v622
    %v879 = vmul.f32 %v623, %v623
    %v880 = vmul.f32 %v624, %v624
    %v881 = vmul.f32 %v625, %v625
    %v882 = vmul.f32 %v626, %v626
    %v883 = vmul.f32 %v627, %v627
    %v884 = vmul.f32 %v628, %v628
    %v885 = vmul.f32 %v629, %v629
    %v886 = vmul.f32 %v630, %v630
    %v887 = vmul.f32 %v631, %v631
    %v888 = vmul.f32 %v632, %v632
    %v889 = vmul.f32 %v633, %v633
    %v890 = vmul.f32 %v634, %v634
    %v891 = vmul.f32 %v635, %v635
    %v892 = vmul.f32 %v636, %v636
    %v893 = vmul.f32 %v637, %v637
    %v894 = vmul.f32 %v638, %v638
    %v895 = vmul.f32 %v639, %v639
    %v896 = vmul.f32 %v640, %v640
    %v897 = vmul.f32 %v641, %v641
    %v898 = vmul.f32 %v642, %v642
    %v899 = vmul.f32 %v643, %v643
    %v900 = vmul.f32 %v644, %v644
    %v901 = vmul.f32 %v645, %v645
    %v902 = vmul.f32 %v646, %v646
    %v903 = vmul.f32 %v647, %v647
    %v904 = vmul.f32 %v648, %v648
    %v905 = vmul.f32 %v649, %v649
    %v906 = vmul.f32 %v650, %v650
    %v907 = vmul.f32 %v651, %v651
    %v908 = vmul.f32 %v652, %v652
    %v909 = vmul.f32 %v653, %v653
    %v910 = vmul.f32 %v654, %v654
    %v911 = vmul.f32 %v655, %v655
    %v912 = vmul.f32 %v656, %v656
    %v913 = vmul.f32 %v657, %v657
    %v914 = vmul.f32 %v658, %v658
    %v915 = vmul.f32 %v659, %v659
    %v916 = vmul.f32 %v660, %v660
    %v917 = vmul.f32 %v661, %v661
    %v918 = vmul.f32 %v662, %v662
    %v919 = vmul.f32 %v663, %v663
    %v920 = vmul.f32 %v664, %v664
    %v921 = vmul.f32 %v665, %v665
    %v922 = vmul.f32 %v666, %v666
    %v923 = vmul.f32 %v667, %v667
    %v924 = vmul.f32 %v668, %v668
    %v925 = vmul.f32 %v669, %v669
    %v926 = vmul.f32 %v670, %v670
    %v927 = vmul.f32 %v671, %v671
    %v928 = vmul.f32 %v672, %v672
    %v929 = vmul.f32 %v673, %v673
    %v930 = vmul.f32 %v674, %v674
    %v931 = vmul.f32 %v675, %v675
    %v932 = vmul.f32 %v676, %v676
    %v933 = vmul.f32 %v677, %v677
    %v934 = vmul.f32 %v678, %v678
    %v935 = vmul.f32 %v679, %v679
    %v936 = vmul.f32 %v680, %v680
    %v937 = vmul.f32 %v681, %v681
    %v938 = vmul.f32 %v682, %v682
    %v939 = vmul.f32 %v683, %v683
    %v940 = vmul.f32 %v684, %v684
    %v941 = vmul.f32 %v685, %v685
    %v942 = vmul.f32 %v686, %v686
    %v943 = vmul.f32 %v687, %v687
    %v944 = vmul.f32 %v688, %v688
    %v945 = vmul.f32 %v689, %v689
    %v946 = vmul.f32 %v690, %v690
    %v947 = vmul.f32 %v691, %v691
    %v948 = vmul.f32 %v692, %v692
    %v949 = vmul.f32 %v693, %v693
    %v950 = vmul.f32 %v694, %v694
    %v951 = vmul.f32 %v695, %v695
    %v952 = vmul.f32 %v696, %v696
    %v953 = vmul.f32 %v697, %v697
    %v954 = vmul.f32 %v698, %v698
    %v955 = vmul.f32 %v699, %v699
    %v956 = vmul.f32 %v700, %v700
    %v957 = vmul.f32 %v701, %v701
    %v958 = vmul.f32 %v702, %v702
    %v959 = vmul.f32 %v703, %v703
    %v960 = vmul.f32 %v704, %v704
    %v961 = vmul.f32 %v705, %v705
    %v962 = vmul.f32 %v706, %v706
    %v963 = vmul.f32 %v707, %v707
    %v964 = vmul.f32 %v708, %v708
    %v965 = vmul.f32 %v709, %v709
    %v966 = vmul.f32 %v710, %v710
    %v967 = vmul.f32 %v711, %v711
    %v968 = vmul.f32 %v712, %v712
    %v969 = vmul.f32 %v713, %v713
    %v970 = vmul.f32 %v714, %v714
    %v971 = vmul.f32 %v715, %v715
    %v972 = vmul.f32 %v716, %v716
    %v973 = vmul.f32 %v717, %v717
    %v974 = vmul.f32 %v718, %v718
    %v975 = vmul.f32 %v719, %v719
    %v976 = vmul.f32 %v720, %v720
    %v977 = vmul.f32 %v721, %v721
    %v978 = vmul.f32 %v722, %v722
    %v979 = vmul.f32 %v723, %v723
    %v980 = vmul.f32 %v724, %v724
    %v981 = vmul.f32 %v725, %v725
    %v982 = vmul.f32 %v726, %v726
    %v983 = vmul.f32 %v727, %v727
    %v984 = vmul.f32 %v728, %v728
    %v985 = vmul.f32 %v729, %v729
    %v986 = vmul.f32 %v730, %v730
    %v987 = vmul.f32 %v731, %v731
    %v988 = vmul.f32 %v732, %v732
    %v989 = vmul.f32 %v733, %v733
    %v990 = vmul.f32 %v734, %v734
    %v991 = vmul.f32 %v735, %v735
    %v992 = vmul.f32 %v736, %v736
    %v993 = vmul.f32 %v737, %v737
    %v994 = vmul.f32 %v738, %v738
    %v995 = vmul.f32 %v739, %v739
    %v996 = vmul.f32 %v740, %v740
    %v997 = vmul.f32 %v741, %v741
    %v998 = vmul.f32 %v742, %v742
    %v999 = vmul.f32 %v743, %v743
    %v1000 = vmul.f32 %v744, %v744
    %v1001 = vmul.f32 %v745, %v745
    %v1002 = vmul.f32 %v746, %v746
    %v1003 = vmul.f32 %v747, %v747
    %v1004 = vmul.f32 %v748, %v748
    %v1005 = vmul.f32 %v749, %v749
    %v1006 = vmul.f32 %v750, %v750
    %v1007 = vmul.f32 %v751, %v751
    %v1008 = vmul.f32 %v752, %v752
    %v1009 = vmul.f32 %v753, %v753
    %v1010 = vmul.f32 %v754, %v754
    %v1011 = vmul.f32 %v755, %v755
    %v1012 = vmul.f32 %v756, %v756
    %v1013 = vmul.f32 %v757, %v757
    %v1014 = vmul.f32 %v758, %v758
    %v1015 = vmul.f32 %v759, %v759
    %v1016 = vmul.f32 %v760, %v760
    %v1017 = vmul.f32 %v761, %v761
    %v1018 = vmul.f32 %v762, %v762
    %v1019 = vmul.f32 %v763, %v763
    %v1020 = vmul.f32 %v764, %v764
    %v1021 = vmul.f32 %v765, %v765
    %v1022 = vmul.f32 %v766, %v766
    %v1023 = vmul.f32 %v767, %v767
    %v1024 = vmul.f32 %v768, %v768
    %v1025 = vmul.f32 %v769, %v769
    %v1026 = vmul.f32 %v770, %v770
    %v1027 = vmul.f32 %v771, %v771
    %v1028 = vmul.f32 %v772, %v772
    %v1029 = vmul.f32 %v773, %v773
    %v1030 = vmul.f32 %v774, %v774
    %v1031 = vmul.f32 %v775, %v775
    %v1032 = vmul.f32 %v776, %v776
    %v1033 = vmul.f32 %v777, %v777
    %v1034 = vmul.f32 %v778, %v778
    %v1035 = vmul.f32 %v779, %v779
    %v1036 = vmul.f32 %v780, %v780
    %v1037 = vmul.f32 %v781, %v781
    %v1038 = vmul.f32 %v782, %v782
    %v1039 = vmul.f32 %v783, %v783
    %v1040 = vmul.f32 %v784, %v784
    %v1041 = vmul.f32 %v785, %v785
    %v1042 = vmul.f32 %v786, %v786
    %v1043 = vmul.f32 %v787, %v787
    %v1044 = vmul.f32 %v788, %v788
    %v1045 = vmul.f32 %v789, %v789
    %v1046 = vmul.f32 %v790, %v790
    %v1047 = vmul.f32 %v791, %v791
    %v1048 = vmul.f32 %v792, %v792
    %v1049 = vmul.f32 %v793, %v793
    %v1050 = vmul.f32 %v794, %v794
    %v1051 = vmul.f32 %v795, %v795
    %v1052 = vmul.f32 %v796, %v796
    %v1053 = vmul.f32 %v797, %v797
    %v1054 = vmul.f32 %v798, %v798
    %v1055 = vmul.f32 %v799, %v799
    %v1056 = vmul.f32 %v800, %v800
    %v1057 = vmul.f32 %v801, %v801
    %v1058 = vmul.f32 %v802, %v802
    %v1059 = vmul.f32 %v803, %v803
    %v1060 = vmul.f32 %v804, %v804
    %v1061 = vmul.f32 %v805, %v805
    %v1062 = vmul.f32 %v806, %v806
    %v1063 = vmul.f32 %v807, %v807
    %v1064 = vmul.f32 %v808, %v808
    %v1065 = vmul.f32 %v809, %v809
    %v1066 = vmul.f32 %v810, %v810
    %v1067 = vmul.f32 %v811, %v811
    %v1068 = vmul.f32 %v812, %v812
    %v1069 = vmul.f32 %v813, %v813
    %v1070 = vmul.f32 %v814, %v814
    %v1071 = vmul.f32 %v815, %v815
    %v1072 = vmul.f32 %v816, %v816
    %v1073 = vmul.f32 %v817, %v817
    %v1074 = vmul.f32 %v818, %v818
    %v1075 = vmul.f32 %v819, %v819
    %v1076 = vmul.f32 %v820, %v820
    %v1077 = vmul.f32 %v821, %v821
    %v1078 = vmul.f32 %v822, %v822
    %v1079 = vmul.f32 %v823, %v823
    %v1080 = vmul.f32 %v824, %v824
    %v1081 = vmul.f32 %v825, %v825
    %v1082 = vmul.f32 %v826, %v826
    %v1083 = vmul.f32 %v827, %v827
    %v1084 = vmul.f32 %v828, %v828
    %v1085 = vmul.f32 %v829, %v829
    %v1086 = vmul.f32 %v830, %v830
    %v1087 = vmul.f32 %v831, %v831
    %v1088 = vmul.f32 %v832, %v832
    %v1089 = vld [vmem:[#allocation2] sm:$0xff]
    %v1090 = vadd.f32 %v833, %v834
    %v1091 = vadd.f32 %v1090, %v835
    %v1092 = vadd.f32 %v1091, %v836
    %v1093 = vadd.f32 %v1092, %v837
    %v1094 = vadd.f32 %v1093, %v838
    %v1095 = vadd.f32 %v1094, %v839
    %v1096 = vadd.f32 %v1095, %v840
    %v1097 = vadd.f32 %v1096, %v841
    %v1098 = vadd.f32 %v1097, %v842
    %v1099 = vadd.f32 %v1098, %v843
    %v1100 = vadd.f32 %v1099, %v844
    %v1101 = vadd.f32 %v1100, %v845
    %v1102 = vadd.f32 %v1101, %v846
    %v1103 = vadd.f32 %v1102, %v847
    %v1104 = vadd.f32 %v1103, %v848
    %v1105 = vadd.f32 %v1104, %v849
    %v1106 = vadd.f32 %v1105, %v850
    %v1107 = vadd.f32 %v1106, %v851
    %v1108 = vadd.f32 %v1107, %v852
    %v1109 = vadd.f32 %v1108, %v853
    %v1110 = vadd.f32 %v1109, %v854
    %v1111 = vadd.f32 %v1110, %v855
    %v1112 = vadd.f32 %v1111, %v856
    %v1113 = vadd.f32 %v1112, %v857
    %v1114 = vadd.f32 %v1113, %v858
    %v1115 = vadd.f32 %v1114, %v859
    %v1116 = vadd.f32 %v1115, %v860
    %v1117 = vadd.f32 %v1116, %v861
    %v1118 = vadd.f32 %v1117, %v862
    %v1119 = vadd.f32 %v1118, %v863
    %v1120 = vadd.f32 %v1119, %v864
    %v1121 = vadd.f32 %v1120, %v865
    %v1122 = vadd.f32 %v1121, %v866
    %v1123 = vadd.f32 %v1122, %v867
    %v1124 = vadd.f32 %v1123, %v868
    %v1125 = vadd.f32 %v1124, %v869
    %v1126 = vadd.f32 %v1125, %v870
    %v1127 = vadd.f32 %v1126, %v871
    %v1128 = vadd.f32 %v1127, %v872
    %v1129 = vadd.f32 %v1128, %v873
    %v1130 = vadd.f32 %v1129, %v874
    %v1131 = vadd.f32 %v1130, %v875
    %v1132 = vadd.f32 %v1131, %v876
    %v1133 = vadd.f32 %v1132, %v877
    %v1134 = vadd.f32 %v1133, %v878
    %v1135 = vadd.f32 %v1134, %v879
    %v1136 = vadd.f32 %v1135, %v880
    %v1137 = vadd.f32 %v1136, %v881
    %v1138 = vadd.f32 %v1137, %v882
    %v1139 = vadd.f32 %v1138, %v883
    %v1140 = vadd.f32 %v1139, %v884
    %v1141 = vadd.f32 %v1140, %v885
    %v1142 = vadd.f32 %v1141, %v886
    %v1143 = vadd.f32 %v1142, %v887
    %v1144 = vadd.f32 %v1143, %v888
    %v1145 = vadd.f32 %v1144, %v889
    %v1146 = vadd.f32 %v1145, %v890
    %v1147 = vadd.f32 %v1146, %v891
    %v1148 = vadd.f32 %v1147, %v892
    %v1149 = vadd.f32 %v1148, %v893
    %v1150 = vadd.f32 %v1149, %v894
    %v1151 = vadd.f32 %v1150, %v895
    %v1152 = vadd.f32 %v1151, %v896
    %v1153 = vadd.f32 %v1152, %v897
    %v1154 = vadd.f32 %v1153, %v898
    %v1155 = vadd.f32 %v1154, %v899
    %v1156 = vadd.f32 %v1155, %v900
    %v1157 = vadd.f32 %v1156, %v901
    %v1158 = vadd.f32 %v1157, %v902
    %v1159 = vadd.f32 %v1158, %v903
    %v1160 = vadd.f32 %v1159, %v904
    %v1161 = vadd.f32 %v1160, %v905
    %v1162 = vadd.f32 %v1161, %v906
    %v1163 = vadd.f32 %v1162, %v907
    %v1164 = vadd.f32 %v1163, %v908
    %v1165 = vadd.f32 %v1164, %v909
    %v1166 = vadd.f32 %v1165, %v910
    %v1167 = vadd.f32 %v1166, %v911
    %v1168 = vadd.f32 %v1167, %v912
    %v1169 = vadd.f32 %v1168, %v913
    %v1170 = vadd.f32 %v1169, %v914
    %v1171 = vadd.f32 %v1170, %v915
    %v1172 = vadd.f32 %v1171, %v916
    %v1173 = vadd.f32 %v1172, %v917
    %v1174 = vadd.f32 %v1173, %v918
    %v1175 = vadd.f32 %v1174, %v919
    %v1176 = vadd.f32 %v1175, %v920
    %v1177 = vadd.f32 %v1176, %v921
    %v1178 = vadd.f32 %v1177, %v922
    %v1179 = vadd.f32 %v1178, %v923
    %v1180 = vadd.f32 %v1179, %v924
    %v1181 = vadd.f32 %v1180, %v925
    %v1182 = vadd.f32 %v1181, %v926
    %v1183 = vadd.f32 %v1182, %v927
    %v1184 = vadd.f32 %v1183, %v928
    %v1185 = vadd.f32 %v1184, %v929
    %v1186 = vadd.f32 %v1185, %v930
    %v1187 = vadd.f32 %v1186, %v931
    %v1188 = vadd.f32 %v1187, %v932
    %v1189 = vadd.f32 %v1188, %v933
    %v1190 = vadd.f32 %v1189, %v934
    %v1191 = vadd.f32 %v1190, %v935
    %v1192 = vadd.f32 %v1191, %v936
    %v1193 = vadd.f32 %v1192, %v937
    %v1194 = vadd.f32 %v1193, %v938
    %v1195 = vadd.f32 %v1194, %v939
    %v1196 = vadd.f32 %v1195, %v940
    %v1197 = vadd.f32 %v1196, %v941
    %v1198 = vadd.f32 %v1197, %v942
    %v1199 = vadd.f32 %v1198, %v943
    %v1200 = vadd.f32 %v1199, %v944
    %v1201 = vadd.f32 %v1200, %v945
    %v1202 = vadd.f32 %v1201, %v946
    %v1203 = vadd.f32 %v1202, %v947
    %v1204 = vadd.f32 %v1203, %v948
    %v1205 = vadd.f32 %v1204, %v949
    %v1206 = vadd.f32 %v1205, %v950
    %v1207 = vadd.f32 %v1206, %v951
    %v1208 = vadd.f32 %v1207, %v952
    %v1209 = vadd.f32 %v1208, %v953
    %v1210 = vadd.f32 %v1209, %v954
    %v1211 = vadd.f32 %v1210, %v955
    %v1212 = vadd.f32 %v1211, %v956
    %v1213 = vadd.f32 %v1212, %v957
    %v1214 = vadd.f32 %v1213, %v958
    %v1215 = vadd.f32 %v1214, %v959
    %v1216 = vadd.f32 %v1215, %v960
    %v1217 = vadd.f32 %v1216, %v961
    %v1218 = vadd.f32 %v1217, %v962
    %v1219 = vadd.f32 %v1218, %v963
    %v1220 = vadd.f32 %v1219, %v964
    %v1221 = vadd.f32 %v1220, %v965
    %v1222 = vadd.f32 %v1221, %v966
    %v1223 = vadd.f32 %v1222, %v967
    %v1224 = vadd.f32 %v1223, %v968
    %v1225 = vadd.f32 %v1224, %v969
    %v1226 = vadd.f32 %v1225, %v970
    %v1227 = vadd.f32 %v1226, %v971
    %v1228 = vadd.f32 %v1227, %v972
    %v1229 = vadd.f32 %v1228, %v973
    %v1230 = vadd.f32 %v1229, %v974
    %v1231 = vadd.f32 %v1230, %v975
    %v1232 = vadd.f32 %v1231, %v976
    %v1233 = vadd.f32 %v1232, %v977
    %v1234 = vadd.f32 %v1233, %v978
    %v1235 = vadd.f32 %v1234, %v979
    %v1236 = vadd.f32 %v1235, %v980
    %v1237 = vadd.f32 %v1236, %v981
    %v1238 = vadd.f32 %v1237, %v982
    %v1239 = vadd.f32 %v1238, %v983
    %v1240 = vadd.f32 %v1239, %v984
    %v1241 = vadd.f32 %v1240, %v985
    %v1242 = vadd.f32 %v1241, %v986
    %v1243 = vadd.f32 %v1242, %v987
    %v1244 = vadd.f32 %v1243, %v988
    %v1245 = vadd.f32 %v1244, %v989
    %v1246 = vadd.f32 %v1245, %v990
    %v1247 = vadd.f32 %v1246, %v991
    %v1248 = vadd.f32 %v1247, %v992
    %v1249 = vadd.f32 %v1248, %v993
    %v1250 = vadd.f32 %v1249, %v994
    %v1251 = vadd.f32 %v1250, %v995
    %v1252 = vadd.f32 %v1251, %v996
    %v1253 = vadd.f32 %v1252, %v997
    %v1254 = vadd.f32 %v1253, %v998
    %v1255 = vadd.f32 %v1254, %v999
    %v1256 = vadd.f32 %v1255, %v1000
    %v1257 = vadd.f32 %v1256, %v1001
    %v1258 = vadd.f32 %v1257, %v1002
    %v1259 = vadd.f32 %v1258, %v1003
    %v1260 = vadd.f32 %v1259, %v1004
    %v1261 = vadd.f32 %v1260, %v1005
    %v1262 = vadd.f32 %v1261, %v1006
    %v1263 = vadd.f32 %v1262, %v1007
    %v1264 = vadd.f32 %v1263, %v1008
    %v1265 = vadd.f32 %v1264, %v1009
    %v1266 = vadd.f32 %v1265, %v1010
    %v1267 = vadd.f32 %v1266, %v1011
    %v1268 = vadd.f32 %v1267, %v1012
    %v1269 = vadd.f32 %v1268, %v1013
    %v1270 = vadd.f32 %v1269, %v1014
    %v1271 = vadd.f32 %v1270, %v1015
    %v1272 = vadd.f32 %v1271, %v1016
    %v1273 = vadd.f32 %v1272, %v1017
    %v1274 = vadd.f32 %v1273, %v1018
    %v1275 = vadd.f32 %v1274, %v1019
    %v1276 = vadd.f32 %v1275, %v1020
    %v1277 = vadd.f32 %v1276, %v1021
    %v1278 = vadd.f32 %v1277, %v1022
    %v1279 = vadd.f32 %v1278, %v1023
    %v1280 = vadd.f32 %v1279, %v1024
    %v1281 = vadd.f32 %v1280, %v1025
    %v1282 = vadd.f32 %v1281, %v1026
    %v1283 = vadd.f32 %v1282, %v1027
    %v1284 = vadd.f32 %v1283, %v1028
    %v1285 = vadd.f32 %v1284, %v1029
    %v1286 = vadd.f32 %v1285, %v1030
    %v1287 = vadd.f32 %v1286, %v1031
    %v1288 = vadd.f32 %v1287, %v1032
    %v1289 = vadd.f32 %v1288, %v1033
    %v1290 = vadd.f32 %v1289, %v1034
    %v1291 = vadd.f32 %v1290, %v1035
    %v1292 = vadd.f32 %v1291, %v1036
    %v1293 = vadd.f32 %v1292, %v1037
    %v1294 = vadd.f32 %v1293, %v1038
    %v1295 = vadd.f32 %v1294, %v1039
    %v1296 = vadd.f32 %v1295, %v1040
    %v1297 = vadd.f32 %v1296, %v1041
    %v1298 = vadd.f32 %v1297, %v1042
    %v1299 = vadd.f32 %v1298, %v1043
    %v1300 = vadd.f32 %v1299, %v1044
    %v1301 = vadd.f32 %v1300, %v1045
    %v1302 = vadd.f32 %v1301, %v1046
    %v1303 = vadd.f32 %v1302, %v1047
    %v1304 = vadd.f32 %v1303, %v1048
    %v1305 = vadd.f32 %v1304, %v1049
    %v1306 = vadd.f32 %v1305, %v1050
    %v1307 = vadd.f32 %v1306, %v1051
    %v1308 = vadd.f32 %v1307, %v1052
    %v1309 = vadd.f32 %v1308, %v1053
    %v1310 = vadd.f32 %v1309, %v1054
    %v1311 = vadd.f32 %v1310, %v1055
    %v1312 = vadd.f32 %v1311, %v1056
    %v1313 = vadd.f32 %v1312, %v1057
    %v1314 = vadd.f32 %v1313, %v1058
    %v1315 = vadd.f32 %v1314, %v1059
    %v1316 = vadd.f32 %v1315, %v1060
    %v1317 = vadd.f32 %v1316, %v1061
    %v1318 = vadd.f32 %v1317, %v1062
    %v1319 = vadd.f32 %v1318, %v1063
    %v1320 = vadd.f32 %v1319, %v1064
    %v1321 = vadd.f32 %v1320, %v1065
    %v1322 = vadd.f32 %v1321, %v1066
    %v1323 = vadd.f32 %v1322, %v1067
    %v1324 = vadd.f32 %v1323, %v1068
    %v1325 = vadd.f32 %v1324, %v1069
    %v1326 = vadd.f32 %v1325, %v1070
    %v1327 = vadd.f32 %v1326, %v1071
    %v1328 = vadd.f32 %v1327, %v1072
    %v1329 = vadd.f32 %v1328, %v1073
    %v1330 = vadd.f32 %v1329, %v1074
    %v1331 = vadd.f32 %v1330, %v1075
    %v1332 = vadd.f32 %v1331, %v1076
    %v1333 = vadd.f32 %v1332, %v1077
    %v1334 = vadd.f32 %v1333, %v1078
    %v1335 = vadd.f32 %v1334, %v1079
    %v1336 = vadd.f32 %v1335, %v1080
    %v1337 = vadd.f32 %v1336, %v1081
    %v1338 = vadd.f32 %v1337, %v1082
    %v1339 = vadd.f32 %v1338, %v1083
    %v1340 = vadd.f32 %v1339, %v1084
    %v1341 = vadd.f32 %v1340, %v1085
    %v1342 = vadd.f32 %v1341, %v1086
    %v1343 = vadd.f32 %v1342, %v1087
    %v1344 = vadd.f32 %v1343, %v1088
    %v1345 = vadd.f32 %v1089, %v1344
    %1346 = vst [vmem:[#allocation2] sm:$0xff] %v1345
    // Predicated region
    $region22: #{tpu_custom_call.1} parent=1 // pred_check
      %p1347 = pneg %p60
    $region23: #{tpu_custom_call.1} parent=1 // pred_check_branch
      %1349 = sbr.rel (%p1347) target = $region25
    $region24: #{tpu_custom_call.1} parent=1 // pred_region
      %v1350 = vld [vmem:[#allocation2] sm:$0xff]
      %1351 = vadd.xlane.f32.xlu0 %v1350
      %v1352 = vpop.xlane.xlu0 %1351
      %v1353 = vrot.slane %v1352, 4
      %v1354 = vadd.f32 %v1352, %v1353
      %v1355 = vrot.slane %v1354, 2
      %v1356 = vadd.f32 %v1354, %v1355
      %v1357 = vrot.slane %v1356, 1
      %v1358 = vadd.f32 %v1356, %v1357
      %s1359 = vtos %v1358
      %v1360 = vstv %s1359
      %vm1361 = vcmask 0
      %1362 = vst.msk [vmem:[#allocation8] sm:$0x1] %vm1361, %v1360
    $region25: #{tpu_custom_call.1} parent=1 // pred_fallthru
      _
    // Predicated region
    $region26: #{tpu_custom_call.1} parent=1 // pred_check
      _
    $region27: #{tpu_custom_call.1} parent=1 // pred_check_branch
      %1364 = sbr.rel (0) target = $region29
    $region28: #{tpu_custom_call.1} parent=1 // pred_region
      %s1366 = ssub.s32 16, 16
      %1367 = vsyncadd [#allocation5], %s1366
      %s1369 = sshll.u32 [#allocation8], 4
      %s1370 = int_to_ptr.vmem [resolvable:$true] %s1369
      %1372 = dma.vmem_to_hbm [thread:$0]  %s1370, 16, %s2, [#allocation5]
    $region29: #{tpu_custom_call.1} parent=1 // pred_fallthru
      _
    // Predicated region
    $region30: #{tpu_custom_call.1} parent=1 // pred_check
      _
    $region31: #{tpu_custom_call.1} parent=1 // pred_check_branch
      %1374 = sbr.rel (0) target = $region33
    $region32: #{tpu_custom_call.1} parent=1 // pred_region
      %1375 = dma.done [#allocation5], 16
    $region33: #{tpu_custom_call.1} parent=1 // pred_fallthru
      _
    %1376 = vsyncpa [#allocation4], 1
    %1377 = vsyncpa [#allocation7], 1
    %1378 = vsyncpa [#allocation5], 1

</llo_original>
